<compile_context>
chip_gen: v7x
topology: tpu7x:2x2x1
jax: 0.10.0
libtpu: 0.0.40
codegen_flags: <defaults>
</compile_context>

<pallas_src>
import functools
import math

import jax
import jax.numpy as jnp
from jax.experimental import pallas as pl
from jax.experimental.pallas import tpu as pltpu


# ---------------------------------------------------------------------------
# Tile / VMEM sizing helpers (pure host-side Python)
# ---------------------------------------------------------------------------

def _vmem_capacity_bytes():
    try:
        info = pltpu.get_tpu_info()
        cap = getattr(info, "vmem_capacity_bytes", None)
        if cap:
            return int(cap)
    except Exception:
        pass
    return 64 * 1024 * 1024  # conservative default (v7x per-TC)


def _estimate_attn_kernel_vmem(TL, L, D, Dff, H, attn_bytes):
    """Rough VMEM footprint of the fused attention+FFN kernel for one tile."""
    dbuf = 2                                             # default double-buffering
    kv = 2 * (L * D * 2) * dbuf                          # full-seq K and V (bf16)
    x_io = 2 * (TL * D * 4) * dbuf                       # x tile in + out tile (f32)
    attn_o = (H * TL * L * attn_bytes) * dbuf            # attention-prob output tile
    weights = (2 * D * D + 2 * D * Dff) * 2 * dbuf       # w_q, w_o, w1, w2 (bf16)
    biases = (16 * D + 2 * Dff) * 4 * dbuf               # biases + LN params (generous)
    scratch = 3 * TL * L * 4 + TL * Dff * 4 + 2 * TL * D * 4   # scores/probs/h1/concat temps
    return kv + x_io + attn_o + weights + biases + scratch


def _pick_seq_tile(L, D, Dff, H, attn_bytes, vmem_budget, target):
    """Largest multiple-of-16 tile <= target that divides L and fits the VMEM budget."""
    cands = [t for t in range(16, min(L, target) + 1, 16) if L % t == 0]
    if not cands:
        return L  # tiny / odd L: single tile spanning the full sequence
    for t in reversed(cands):
        if _estimate_attn_kernel_vmem(t, L, D, Dff, H, attn_bytes) <= vmem_budget:
            return t
    return cands[0]


# ---------------------------------------------------------------------------
# Pallas kernels
# ---------------------------------------------------------------------------

def kv_proj_kernel(x_ref, w_ref, b_ref, k_ref, v_ref):
    # x: (1, TL, D)   w: (D, 2D) bf16   b: (1, 2D) f32   k/v out: (1, TL, D) bf16
    D = k_ref.shape[-1]
    x = x_ref[0].astype(jnp.bfloat16)
    kv = jnp.dot(x, w_ref[...], preferred_element_type=jnp.float32) + b_ref[...]
    k_ref[0] = kv[:, :D].astype(k_ref.dtype)
    v_ref[0] = kv[:, D:].astype(v_ref.dtype)


def attn_ffn_kernel(x_ref, k_ref, v_ref,
                    wq_ref, bq_ref, wo_ref, bo_ref,
                    g1_ref, be1_ref,
                    w1_ref, b1_ref, w2_ref, b2_ref,
                    g2_ref, be2_ref,
                    o_ref, *maybe_attn, n_heads, approx_recip):
    """q-proj + multi-head attention + out-proj + residual + norm1 + FFN + residual + norm2."""
    f32 = jnp.float32
    bf16 = jnp.bfloat16
    a_ref = maybe_attn[0] if maybe_attn else None

    x = x_ref[0].astype(f32)              # (TQ, D) residual input
    xb = x_ref[0].astype(bf16)
    k = k_ref[0]                          # (L, D) bf16
    v = v_ref[0]                          # (L, D) bf16

    TQ, D = x.shape
    H = n_heads
    Dh = D // H

    # q projection; the 1/sqrt(Dh) softmax scale is pre-folded into wq/bq by the wrapper.
    q = (jnp.dot(xb, wq_ref[...], preferred_element_type=f32) + bq_ref[...]).astype(bf16)

    # Statically unrolled head loop with lane-aligned static slices.
    heads = []
    for h in range(H):
        sl = slice(h * Dh, (h + 1) * Dh)
        s = jnp.dot(q[:, sl], k[:, sl].T, preferred_element_type=f32)     # (TQ, L)
        s = s - jnp.max(s, axis=-1, keepdims=True)
        p = jnp.exp(s)
        p = p * pl.reciprocal(jnp.sum(p, axis=-1, keepdims=True), approx=approx_recip)
        if a_ref is not None:
            a_ref[0, h] = p.astype(a_ref.dtype)
        heads.append(jnp.dot(p.astype(bf16), v[:, sl], preferred_element_type=f32))  # (TQ, Dh)

    # Head concat + single full-contraction out-projection (fills the MXU K dimension).
    o_cat = jnp.concatenate(heads, axis=-1).astype(bf16)                  # (TQ, D)
    new_x = jnp.dot(o_cat, wo_ref[...], preferred_element_type=f32) + bo_ref[...]

    # residual + LayerNorm1 (mean / mean-of-squares in one pass); dropout = identity.
    y = x + new_x
    mu = jnp.mean(y, axis=-1, keepdims=True)
    var = jnp.maximum(jnp.mean(y * y, axis=-1, keepdims=True) - mu * mu, 0.0)
    x1 = (y - mu) * jax.lax.rsqrt(var + 1e-5) * g1_ref[...] + be1_ref[...]

    # conv1(1x1) -> relu -> conv2(1x1) -> residual -> LayerNorm2.
    h1 = jnp.dot(x1.astype(bf16), w1_ref[...], preferred_element_type=f32) + b1_ref[...]
    h1 = jnp.maximum(h1, 0.0)
    y2 = jnp.dot(h1.astype(bf16), w2_ref[...], preferred_element_type=f32) + b2_ref[...]
    z = x1 + y2
    mu2 = jnp.mean(z, axis=-1, keepdims=True)
    var2 = jnp.maximum(jnp.mean(z * z, axis=-1, keepdims=True) - mu2 * mu2, 0.0)
    zn = (z - mu2) * jax.lax.rsqrt(var2 + 1e-5) * g2_ref[...] + be2_ref[...]
    o_ref[0] = zn.astype(o_ref.dtype)


# ---------------------------------------------------------------------------
# Wrapper
# ---------------------------------------------------------------------------

def encoder_layer(x, params, *, n_heads, return_attn=True,
                  attn_dtype=jnp.float32, seq_tile=None, approx_recip=True):
    B, L, D = x.shape
    H = n_heads
    assert D % H == 0, "d_model must be divisible by n_heads"
    Dh = D // H
    Dff = params["w1"].shape[1]
    bf16 = jnp.bfloat16

    # Per-generation VMEM budget / tile target (v5e/v6e: 128 MiB physical; v7x: 64 MiB).
    vmem_cap = _vmem_capacity_bytes()
    vmem_budget = min(int(vmem_cap * 3 // 4), 112 * 1024 * 1024)
    if seq_tile is None:
        seq_tile = 512 if vmem_cap >= 96 * 1024 * 1024 else 256

    attn_bytes = jnp.dtype(attn_dtype).itemsize if return_attn else 0
    TL = _pick_seq_tile(L, D, Dff, H, attn_bytes, vmem_budget, seq_tile)
    n_t = L // TL

    cparams = pltpu.CompilerParams(
        dimension_semantics=("parallel", "parallel"),
        vmem_limit_bytes=vmem_budget,
    )

    # Fold the softmax scale into the q projection (free at runtime).
    scale = 1.0 / math.sqrt(Dh)
    w_q = (params["w_q"].astype(jnp.float32) * scale).astype(bf16)
    b_q = params["b_q"] * scale

    # --- kernel 1: fused K/V projection, tiled over (batch, seq) ---
    k, v = pl.pallas_call(
        kv_proj_kernel,
        out_shape=tuple(jax.ShapeDtypeStruct((B, L, D), bf16) for _ in range(2)),
        grid=(B, n_t),
        in_specs=[
            pl.BlockSpec((1, TL, D), lambda b, t: (b, t, 0)),
            pl.BlockSpec((D, 2 * D), lambda b, t: (0, 0)),       # w_kv resident
            pl.BlockSpec((1, 2 * D), lambda b, t: (0, 0)),       # b_kv resident
        ],
        out_specs=tuple(
            pl.BlockSpec((1, TL, D), lambda b, t: (b, t, 0)) for _ in range(2)
        ),
        compiler_params=cparams,
    )(x, params["w_kv"], params["b_kv"])

    # --- kernel 2: q-proj + attention + out-proj + norm1 + FFN + norm2, per query tile ---
    if return_attn:
        out_shape = (jax.ShapeDtypeStruct((B, L, D), x.dtype),
                     jax.ShapeDtypeStruct((B, H, L, L), attn_dtype))
        out_specs = (pl.BlockSpec((1, TL, D), lambda b, t: (b, t, 0)),
                     pl.BlockSpec((1, H, TL, L), lambda b, t: (b, 0, t, 0)))
    else:
        out_shape = jax.ShapeDtypeStruct((B, L, D), x.dtype)
        out_specs = pl.BlockSpec((1, TL, D), lambda b, t: (b, t, 0))

    result = pl.pallas_call(
        functools.partial(attn_ffn_kernel, n_heads=H, approx_recip=approx_recip),
        out_shape=out_shape,
        grid=(B, n_t),
        in_specs=[
            pl.BlockSpec((1, TL, D), lambda b, t: (b, t, 0)),    # x (residual + q source)
            pl.BlockSpec((1, L, D), lambda b, t: (b, 0, 0)),     # k (full seq)
            pl.BlockSpec((1, L, D), lambda b, t: (b, 0, 0)),     # v (full seq)
            pl.BlockSpec((D, D), lambda b, t: (0, 0)),           # w_q (scaled)
            pl.BlockSpec((1, D), lambda b, t: (0, 0)),           # b_q (scaled)
            pl.BlockSpec((D, D), lambda b, t: (0, 0)),           # w_o
            pl.BlockSpec((1, D), lambda b, t: (0, 0)),           # b_o
            pl.BlockSpec((1, D), lambda b, t: (0, 0)),           # ln1_g
            pl.BlockSpec((1, D), lambda b, t: (0, 0)),           # ln1_b
            pl.BlockSpec((D, Dff), lambda b, t: (0, 0)),         # w1 (conv1)
            pl.BlockSpec((1, Dff), lambda b, t: (0, 0)),         # b1
            pl.BlockSpec((Dff, D), lambda b, t: (0, 0)),         # w2 (conv2)
            pl.BlockSpec((1, D), lambda b, t: (0, 0)),           # b2
            pl.BlockSpec((1, D), lambda b, t: (0, 0)),           # ln2_g
            pl.BlockSpec((1, D), lambda b, t: (0, 0)),           # ln2_b
        ],
        out_specs=out_specs,
        compiler_params=cparams,
    )(x, k, v, w_q, b_q,
      params["w_o"], params["b_o"], params["ln1_g"], params["ln1_b"],
      params["w1"], params["b1"], params["w2"], params["b2"],
      params["ln2_g"], params["ln2_b"])

    if return_attn:
        out, attn = result
        return out, attn
    return result, None


# ---------------------------------------------------------------------------
# Deterministic parameter init + driver
# ---------------------------------------------------------------------------

def init_params(key, d_model, d_ff):
    ks = jax.random.split(key, 10)
    s = 0.02
    f32, bf16 = jnp.float32, jnp.bfloat16
    return {
        # q projection (d_model, d_model); k/v fused (d_model, 2*d_model)
        "w_q": (s * jax.random.normal(ks[0], (d_model, d_model), f32)).astype(bf16),
        "b_q": s * jax.random.normal(ks[1], (1, d_model), f32),
        "w_kv": (s * jax.random.normal(ks[2], (d_model, 2 * d_model), f32)).astype(bf16),
        "b_kv": s * jax.random.normal(ks[3], (1, 2 * d_model), f32),
        # attention out-projection
        "w_o": (s * jax.random.normal(ks[4], (d_model, d_model), f32)).astype(bf16),
        "b_o": s * jax.random.normal(ks[5], (1, d_model), f32),
        # conv1 (kernel_size=1): (d_model, d_ff); conv2: (d_ff, d_model)
        "w1": (s * jax.random.normal(ks[6], (d_model, d_ff), f32)).astype(bf16),
        "b1": s * jax.random.normal(ks[7], (1, d_ff), f32),
        "w2": (s * jax.random.normal(ks[8], (d_ff, d_model), f32)).astype(bf16),
        "b2": s * jax.random.normal(ks[9], (1, d_model), f32),
        # LayerNorm affine params (PyTorch defaults: weight=1, bias=0)
        "ln1_g": jnp.ones((1, d_model), f32),
        "ln1_b": jnp.zeros((1, d_model), f32),
        "ln2_g": jnp.ones((1, d_model), f32),
        "ln2_b": jnp.zeros((1, d_model), f32),
    }


if __name__ == "__main__":
    B, L, d_model, n_heads = 2, 8, 32, 4
    d_ff = 4 * d_model  # PyTorch default d_ff = 4 * d_model

    key = jax.random.PRNGKey(0)
    kx, kp = jax.random.split(key)
    x = jax.random.normal(kx, (B, L, d_model), jnp.float32)
    params = init_params(kp, d_model, d_ff)

    # TODO(synk): dropout has no effect at inference time and is implemented as identity.
    run = jax.jit(
        encoder_layer,
        static_argnames=("n_heads", "return_attn", "attn_dtype", "seq_tile", "approx_recip"),
    )

    # Full module semantics: returns (output, attention probabilities).
    out, attn = run(x, params, n_heads=n_heads)
    out = jax.block_until_ready(out)
    attn = jax.block_until_ready(attn)
    assert out.shape == (B, L, d_model)
    assert attn.shape == (B, n_heads, L, L)
    assert attn.dtype == jnp.float32

    # Fast path: attention-weight output disabled (removes the B*H*L^2 HBM stream).
    out2, attn2 = run(x, params, n_heads=n_heads, return_attn=False)
    out2 = jax.block_until_ready(out2)
    assert out2.shape == (B, L, d_model)
    assert attn2 is None

    print("KERNEL_OK")
</pallas_src>

<mosaic_0001>
module attributes {stable_mosaic.version = 11 : i64} {
  func.func @kv_proj_kernel(%arg0: i32, %arg1: i32, %arg2: memref<1x8x32xf32, #tpu.memory_space<vmem>>, %arg3: memref<32x64xbf16, #tpu.memory_space<vmem>>, %arg4: memref<1x64xf32, #tpu.memory_space<vmem>>, %arg5: memref<1x8x32xbf16, #tpu.memory_space<vmem>>, %arg6: memref<1x8x32xbf16, #tpu.memory_space<vmem>>) attributes {dimension_semantics = [#tpu.dimension_semantics<parallel>, #tpu.dimension_semantics<parallel>], iteration_bounds = array<i64: 2, 1>, scalar_prefetch = 0 : i64, scratch_operands = 0 : i64, tpu.core_type = #tpu.core_type<tc>, window_params = [{transform_indices = @transform_0, window_bounds = array<i64: 1, 8, 32>}, {pipeline_mode = #tpu.pipeline_mode<synchronous>, transform_indices = @transform_1, window_bounds = array<i64: 32, 64>}, {pipeline_mode = #tpu.pipeline_mode<synchronous>, transform_indices = @transform_2, window_bounds = array<i64: 1, 64>}, {transform_indices = @transform_3, window_bounds = array<i64: 1, 8, 32>}, {transform_indices = @transform_4, window_bounds = array<i64: 1, 8, 32>}]} {
    %c0 = arith.constant 0 : index
    %c0_0 = arith.constant 0 : index
    %c0_1 = arith.constant 0 : index
    %0 = vector.load %arg2[%c0, %c0_0, %c0_1] : memref<1x8x32xf32, #tpu.memory_space<vmem>>, vector<1x8x32xf32>
    %1 = vector.shape_cast %0 : vector<1x8x32xf32> to vector<8x32xf32>
    %2 = arith.truncf %1 : vector<8x32xf32> to vector<8x32xbf16>
    %c0_2 = arith.constant 0 : index
    %c0_3 = arith.constant 0 : index
    %3 = vector.load %arg3[%c0_2, %c0_3] : memref<32x64xbf16, #tpu.memory_space<vmem>>, vector<32x64xbf16>
    %cst = arith.constant dense<0.000000e+00> : vector<8x64xf32>
    %4 = tpu.matmul %2, %3, %cst {dimension_numbers = #tpu.dot_dimension_numbers<[1], [0], [0], [1], [0, 0, 1, 1], [], []>} : vector<8x32xbf16>, vector<32x64xbf16>, vector<8x64xf32> -> vector<8x64xf32>
    %c0_4 = arith.constant 0 : index
    %c0_5 = arith.constant 0 : index
    %5 = vector.load %arg4[%c0_4, %c0_5] : memref<1x64xf32, #tpu.memory_space<vmem>>, vector<1x64xf32>
    %6 = vector.broadcast %5 : vector<1x64xf32> to vector<8x64xf32>
    %7 = arith.addf %4, %6 : vector<8x64xf32>
    %8 = vector.extract_strided_slice %7 {offsets = [0, 0], sizes = [8, 32], strides = [1, 1]} : vector<8x64xf32> to vector<8x32xf32>
    %9 = arith.truncf %8 : vector<8x32xf32> to vector<8x32xbf16>
    %c0_6 = arith.constant 0 : index
    %c0_7 = arith.constant 0 : index
    %c0_8 = arith.constant 0 : index
    %10 = vector.load %arg5[%c0_6, %c0_7, %c0_8] : memref<1x8x32xbf16, #tpu.memory_space<vmem>>, vector<1x8x32xbf16>
    %11 = vector.shape_cast %10 : vector<1x8x32xbf16> to vector<8x32xbf16>
    %12 = vector.shape_cast %9 : vector<8x32xbf16> to vector<1x8x32xbf16>
    tpu.vector_store %arg5[%c0_6, %c0_7, %c0_8], %12 {strides = array<i32>} : memref<1x8x32xbf16, #tpu.memory_space<vmem>>, vector<1x8x32xbf16>,
    %13 = vector.extract_strided_slice %7 {offsets = [0, 32], sizes = [8, 32], strides = [1, 1]} : vector<8x64xf32> to vector<8x32xf32>
    %14 = arith.truncf %13 : vector<8x32xf32> to vector<8x32xbf16>
    %c0_9 = arith.constant 0 : index
    %c0_10 = arith.constant 0 : index
    %c0_11 = arith.constant 0 : index
    %15 = vector.load %arg6[%c0_9, %c0_10, %c0_11] : memref<1x8x32xbf16, #tpu.memory_space<vmem>>, vector<1x8x32xbf16>
    %16 = vector.shape_cast %15 : vector<1x8x32xbf16> to vector<8x32xbf16>
    %17 = vector.shape_cast %14 : vector<8x32xbf16> to vector<1x8x32xbf16>
    tpu.vector_store %arg6[%c0_9, %c0_10, %c0_11], %17 {strides = array<i32>} : memref<1x8x32xbf16, #tpu.memory_space<vmem>>, vector<1x8x32xbf16>,
    return
  }
  func.func @transform_0(%arg0: i32, %arg1: i32) -> (i32, i32, i32) {
    %c0_i32 = arith.constant 0 : i32
    %c0_i32_0 = arith.constant 0 : i32
    return %arg0, %arg1, %c0_i32 : i32, i32, i32
  }
  func.func @transform_1(%arg0: i32, %arg1: i32) -> (i32, i32) {
    %c0_i32 = arith.constant 0 : i32
    %c0_i32_0 = arith.constant 0 : i32
    %c0_i32_1 = arith.constant 0 : i32
    return %c0_i32, %c0_i32_0 : i32, i32
  }
  func.func @transform_2(%arg0: i32, %arg1: i32) -> (i32, i32) {
    %c0_i32 = arith.constant 0 : i32
    %c0_i32_0 = arith.constant 0 : i32
    %c0_i32_1 = arith.constant 0 : i32
    return %c0_i32, %c0_i32_0 : i32, i32
  }
  func.func @transform_3(%arg0: i32, %arg1: i32) -> (i32, i32, i32) {
    %c0_i32 = arith.constant 0 : i32
    %c0_i32_0 = arith.constant 0 : i32
    return %arg0, %arg1, %c0_i32 : i32, i32, i32
  }
  func.func @transform_4(%arg0: i32, %arg1: i32) -> (i32, i32, i32) {
    %c0_i32 = arith.constant 0 : i32
    %c0_i32_0 = arith.constant 0 : i32
    return %arg0, %arg1, %c0_i32 : i32, i32, i32
  }
}

module attributes {stable_mosaic.version = 11 : i64} {
  func.func @attn_ffn_kernel(%arg0: i32, %arg1: i32, %arg2: memref<1x8x32xf32, #tpu.memory_space<vmem>>, %arg3: memref<1x8x32xbf16, #tpu.memory_space<vmem>>, %arg4: memref<1x8x32xbf16, #tpu.memory_space<vmem>>, %arg5: memref<32x32xbf16, #tpu.memory_space<vmem>>, %arg6: memref<1x32xf32, #tpu.memory_space<vmem>>, %arg7: memref<32x32xbf16, #tpu.memory_space<vmem>>, %arg8: memref<1x32xf32, #tpu.memory_space<vmem>>, %arg9: memref<1x32xf32, #tpu.memory_space<vmem>>, %arg10: memref<1x32xf32, #tpu.memory_space<vmem>>, %arg11: memref<32x128xbf16, #tpu.memory_space<vmem>>, %arg12: memref<1x128xf32, #tpu.memory_space<vmem>>, %arg13: memref<128x32xbf16, #tpu.memory_space<vmem>>, %arg14: memref<1x32xf32, #tpu.memory_space<vmem>>, %arg15: memref<1x32xf32, #tpu.memory_space<vmem>>, %arg16: memref<1x32xf32, #tpu.memory_space<vmem>>, %arg17: memref<1x8x32xf32, #tpu.memory_space<vmem>>, %arg18: memref<1x4x8x8xf32, #tpu.memory_space<vmem>>) attributes {dimension_semantics = [#tpu.dimension_semantics<parallel>, #tpu.dimension_semantics<parallel>], iteration_bounds = array<i64: 2, 1>, scalar_prefetch = 0 : i64, scratch_operands = 0 : i64, tpu.core_type = #tpu.core_type<tc>, window_params = [{transform_indices = @transform_0, window_bounds = array<i64: 1, 8, 32>}, {transform_indices = @transform_1, window_bounds = array<i64: 1, 8, 32>}, {transform_indices = @transform_2, window_bounds = array<i64: 1, 8, 32>}, {pipeline_mode = #tpu.pipeline_mode<synchronous>, transform_indices = @transform_3, window_bounds = array<i64: 32, 32>}, {pipeline_mode = #tpu.pipeline_mode<synchronous>, transform_indices = @transform_4, window_bounds = array<i64: 1, 32>}, {pipeline_mode = #tpu.pipeline_mode<synchronous>, transform_indices = @transform_5, window_bounds = array<i64: 32, 32>}, {pipeline_mode = #tpu.pipeline_mode<synchronous>, transform_indices = @transform_6, window_bounds = array<i64: 1, 32>}, {pipeline_mode = #tpu.pipeline_mode<synchronous>, transform_indices = @transform_7, window_bounds = array<i64: 1, 32>}, {pipeline_mode = #tpu.pipeline_mode<synchronous>, transform_indices = @transform_8, window_bounds = array<i64: 1, 32>}, {pipeline_mode = #tpu.pipeline_mode<synchronous>, transform_indices = @transform_9, window_bounds = array<i64: 32, 128>}, {pipeline_mode = #tpu.pipeline_mode<synchronous>, transform_indices = @transform_10, window_bounds = array<i64: 1, 128>}, {pipeline_mode = #tpu.pipeline_mode<synchronous>, transform_indices = @transform_11, window_bounds = array<i64: 128, 32>}, {pipeline_mode = #tpu.pipeline_mode<synchronous>, transform_indices = @transform_12, window_bounds = array<i64: 1, 32>}, {pipeline_mode = #tpu.pipeline_mode<synchronous>, transform_indices = @transform_13, window_bounds = array<i64: 1, 32>}, {pipeline_mode = #tpu.pipeline_mode<synchronous>, transform_indices = @transform_14, window_bounds = array<i64: 1, 32>}, {transform_indices = @transform_15, window_bounds = array<i64: 1, 8, 32>}, {transform_indices = @transform_16, window_bounds = array<i64: 1, 4, 8, 8>}]} {
    %c0 = arith.constant 0 : index
    %c0_0 = arith.constant 0 : index
    %c0_1 = arith.constant 0 : index
    %0 = vector.load %arg2[%c0, %c0_0, %c0_1] : memref<1x8x32xf32, #tpu.memory_space<vmem>>, vector<1x8x32xf32>
    %1 = vector.shape_cast %0 : vector<1x8x32xf32> to vector<8x32xf32>
    %c0_2 = arith.constant 0 : index
    %c0_3 = arith.constant 0 : index
    %c0_4 = arith.constant 0 : index
    %2 = vector.load %arg2[%c0_2, %c0_3, %c0_4] : memref<1x8x32xf32, #tpu.memory_space<vmem>>, vector<1x8x32xf32>
    %3 = vector.shape_cast %2 : vector<1x8x32xf32> to vector<8x32xf32>
    %4 = arith.truncf %3 : vector<8x32xf32> to vector<8x32xbf16>
    %c0_5 = arith.constant 0 : index
    %c0_6 = arith.constant 0 : index
    %c0_7 = arith.constant 0 : index
    %5 = vector.load %arg3[%c0_5, %c0_6, %c0_7] : memref<1x8x32xbf16, #tpu.memory_space<vmem>>, vector<1x8x32xbf16>
    %6 = vector.shape_cast %5 : vector<1x8x32xbf16> to vector<8x32xbf16>
    %c0_8 = arith.constant 0 : index
    %c0_9 = arith.constant 0 : index
    %c0_10 = arith.constant 0 : index
    %7 = vector.load %arg4[%c0_8, %c0_9, %c0_10] : memref<1x8x32xbf16, #tpu.memory_space<vmem>>, vector<1x8x32xbf16>
    %8 = vector.shape_cast %7 : vector<1x8x32xbf16> to vector<8x32xbf16>
    %c0_11 = arith.constant 0 : index
    %c0_12 = arith.constant 0 : index
    %9 = vector.load %arg5[%c0_11, %c0_12] : memref<32x32xbf16, #tpu.memory_space<vmem>>, vector<32x32xbf16>
    %cst = arith.constant dense<0.000000e+00> : vector<8x32xf32>
    %10 = tpu.matmul %4, %9, %cst {dimension_numbers = #tpu.dot_dimension_numbers<[1], [0], [0], [1], [0, 0, 1, 1], [], []>} : vector<8x32xbf16>, vector<32x32xbf16>, vector<8x32xf32> -> vector<8x32xf32>
    %c0_13 = arith.constant 0 : index
    %c0_14 = arith.constant 0 : index
    %11 = vector.load %arg6[%c0_13, %c0_14] : memref<1x32xf32, #tpu.memory_space<vmem>>, vector<1x32xf32>
    %12 = vector.broadcast %11 : vector<1x32xf32> to vector<8x32xf32>
    %13 = arith.addf %10, %12 : vector<8x32xf32>
    %14 = arith.truncf %13 : vector<8x32xf32> to vector<8x32xbf16>
    %15 = vector.extract_strided_slice %14 {offsets = [0, 0], sizes = [8, 8], strides = [1, 1]} : vector<8x32xbf16> to vector<8x8xbf16>
    %16 = vector.extract_strided_slice %6 {offsets = [0, 0], sizes = [8, 8], strides = [1, 1]} : vector<8x32xbf16> to vector<8x8xbf16>
    %17 = tpu.transpose %16, [1, 0] : vector<8x8xbf16> -> vector<8x8xbf16>
    %cst_15 = arith.constant dense<0.000000e+00> : vector<8x8xf32>
    %18 = tpu.matmul %15, %17, %cst_15 {dimension_numbers = #tpu.dot_dimension_numbers<[1], [0], [0], [1], [0, 0, 1, 1], [], []>} : vector<8x8xbf16>, vector<8x8xbf16>, vector<8x8xf32> -> vector<8x8xf32>
    %cst_16 = arith.constant dense<0xFF800000> : vector<8xf32>
    %19 = vector.multi_reduction <maximumf>, %18, %cst_16 [1] : vector<8x8xf32> to vector<8xf32>
    %20 = vector.shape_cast %19 : vector<8xf32> to vector<8x1xf32>
    %21 = vector.broadcast %20 : vector<8x1xf32> to vector<8x8xf32>
    %22 = arith.subf %18, %21 : vector<8x8xf32>
    %23 = math.exp %22 : vector<8x8xf32>
    %cst_17 = arith.constant dense<0.000000e+00> : vector<8xf32>
    %24 = vector.multi_reduction <add>, %23, %cst_17 [1] : vector<8x8xf32> to vector<8xf32>
    %25 = vector.shape_cast %24 : vector<8xf32> to vector<8x1xf32>
    %26 = tpu.reciprocal %25 {approx = true} : vector<8x1xf32> -> vector<8x1xf32>
    %27 = vector.broadcast %26 : vector<8x1xf32> to vector<8x8xf32>
    %28 = arith.mulf %23, %27 : vector<8x8xf32>
    %c0_18 = arith.constant 0 : index
    %c0_19 = arith.constant 0 : index
    %c0_20 = arith.constant 0 : index
    %c0_21 = arith.constant 0 : index
    %29 = vector.load %arg18[%c0_18, %c0_19, %c0_20, %c0_21] : memref<1x4x8x8xf32, #tpu.memory_space<vmem>>, vector<1x1x8x8xf32>
    %30 = vector.shape_cast %29 : vector<1x1x8x8xf32> to vector<8x8xf32>
    %31 = vector.shape_cast %28 : vector<8x8xf32> to vector<1x1x8x8xf32>
    tpu.vector_store %arg18[%c0_18, %c0_19, %c0_20, %c0_21], %31 {strides = array<i32>} : memref<1x4x8x8xf32, #tpu.memory_space<vmem>>, vector<1x1x8x8xf32>,
    %32 = arith.truncf %28 : vector<8x8xf32> to vector<8x8xbf16>
    %33 = vector.extract_strided_slice %8 {offsets = [0, 0], sizes = [8, 8], strides = [1, 1]} : vector<8x32xbf16> to vector<8x8xbf16>
    %cst_22 = arith.constant dense<0.000000e+00> : vector<8x8xf32>
    %34 = tpu.matmul %32, %33, %cst_22 {dimension_numbers = #tpu.dot_dimension_numbers<[1], [0], [0], [1], [0, 0, 1, 1], [], []>} : vector<8x8xbf16>, vector<8x8xbf16>, vector<8x8xf32> -> vector<8x8xf32>
    %35 = vector.extract_strided_slice %14 {offsets = [0, 8], sizes = [8, 8], strides = [1, 1]} : vector<8x32xbf16> to vector<8x8xbf16>
    %36 = vector.extract_strided_slice %6 {offsets = [0, 8], sizes = [8, 8], strides = [1, 1]} : vector<8x32xbf16> to vector<8x8xbf16>
    %37 = tpu.transpose %36, [1, 0] : vector<8x8xbf16> -> vector<8x8xbf16>
    %cst_23 = arith.constant dense<0.000000e+00> : vector<8x8xf32>
    %38 = tpu.matmul %35, %37, %cst_23 {dimension_numbers = #tpu.dot_dimension_numbers<[1], [0], [0], [1], [0, 0, 1, 1], [], []>} : vector<8x8xbf16>, vector<8x8xbf16>, vector<8x8xf32> -> vector<8x8xf32>
    %cst_24 = arith.constant dense<0xFF800000> : vector<8xf32>
    %39 = vector.multi_reduction <maximumf>, %38, %cst_24 [1] : vector<8x8xf32> to vector<8xf32>
    %40 = vector.shape_cast %39 : vector<8xf32> to vector<8x1xf32>
    %41 = vector.broadcast %40 : vector<8x1xf32> to vector<8x8xf32>
    %42 = arith.subf %38, %41 : vector<8x8xf32>
    %43 = math.exp %42 : vector<8x8xf32>
    %cst_25 = arith.constant dense<0.000000e+00> : vector<8xf32>
    %44 = vector.multi_reduction <add>, %43, %cst_25 [1] : vector<8x8xf32> to vector<8xf32>
    %45 = vector.shape_cast %44 : vector<8xf32> to vector<8x1xf32>
    %46 = tpu.reciprocal %45 {approx = true} : vector<8x1xf32> -> vector<8x1xf32>
    %47 = vector.broadcast %46 : vector<8x1xf32> to vector<8x8xf32>
    %48 = arith.mulf %43, %47 : vector<8x8xf32>
    %c0_26 = arith.constant 0 : index
    %c1 = arith.constant 1 : index
    %c0_27 = arith.constant 0 : index
    %c0_28 = arith.constant 0 : index
    %49 = vector.load %arg18[%c0_26, %c1, %c0_27, %c0_28] : memref<1x4x8x8xf32, #tpu.memory_space<vmem>>, vector<1x1x8x8xf32>
    %50 = vector.shape_cast %49 : vector<1x1x8x8xf32> to vector<8x8xf32>
    %51 = vector.shape_cast %48 : vector<8x8xf32> to vector<1x1x8x8xf32>
    tpu.vector_store %arg18[%c0_26, %c1, %c0_27, %c0_28], %51 {strides = array<i32>} : memref<1x4x8x8xf32, #tpu.memory_space<vmem>>, vector<1x1x8x8xf32>,
    %52 = arith.truncf %48 : vector<8x8xf32> to vector<8x8xbf16>
    %53 = vector.extract_strided_slice %8 {offsets = [0, 8], sizes = [8, 8], strides = [1, 1]} : vector<8x32xbf16> to vector<8x8xbf16>
    %cst_29 = arith.constant dense<0.000000e+00> : vector<8x8xf32>
    %54 = tpu.matmul %52, %53, %cst_29 {dimension_numbers = #tpu.dot_dimension_numbers<[1], [0], [0], [1], [0, 0, 1, 1], [], []>} : vector<8x8xbf16>, vector<8x8xbf16>, vector<8x8xf32> -> vector<8x8xf32>
    %55 = vector.extract_strided_slice %14 {offsets = [0, 16], sizes = [8, 8], strides = [1, 1]} : vector<8x32xbf16> to vector<8x8xbf16>
    %56 = vector.extract_strided_slice %6 {offsets = [0, 16], sizes = [8, 8], strides = [1, 1]} : vector<8x32xbf16> to vector<8x8xbf16>
    %57 = tpu.transpose %56, [1, 0] : vector<8x8xbf16> -> vector<8x8xbf16>
    %cst_30 = arith.constant dense<0.000000e+00> : vector<8x8xf32>
    %58 = tpu.matmul %55, %57, %cst_30 {dimension_numbers = #tpu.dot_dimension_numbers<[1], [0], [0], [1], [0, 0, 1, 1], [], []>} : vector<8x8xbf16>, vector<8x8xbf16>, vector<8x8xf32> -> vector<8x8xf32>
    %cst_31 = arith.constant dense<0xFF800000> : vector<8xf32>
    %59 = vector.multi_reduction <maximumf>, %58, %cst_31 [1] : vector<8x8xf32> to vector<8xf32>
    %60 = vector.shape_cast %59 : vector<8xf32> to vector<8x1xf32>
    %61 = vector.broadcast %60 : vector<8x1xf32> to vector<8x8xf32>
    %62 = arith.subf %58, %61 : vector<8x8xf32>
    %63 = math.exp %62 : vector<8x8xf32>
    %cst_32 = arith.constant dense<0.000000e+00> : vector<8xf32>
    %64 = vector.multi_reduction <add>, %63, %cst_32 [1] : vector<8x8xf32> to vector<8xf32>
    %65 = vector.shape_cast %64 : vector<8xf32> to vector<8x1xf32>
    %66 = tpu.reciprocal %65 {approx = true} : vector<8x1xf32> -> vector<8x1xf32>
    %67 = vector.broadcast %66 : vector<8x1xf32> to vector<8x8xf32>
    %68 = arith.mulf %63, %67 : vector<8x8xf32>
    %c0_33 = arith.constant 0 : index
    %c2 = arith.constant 2 : index
    %c0_34 = arith.constant 0 : index
    %c0_35 = arith.constant 0 : index
    %69 = vector.load %arg18[%c0_33, %c2, %c0_34, %c0_35] : memref<1x4x8x8xf32, #tpu.memory_space<vmem>>, vector<1x1x8x8xf32>
    %70 = vector.shape_cast %69 : vector<1x1x8x8xf32> to vector<8x8xf32>
    %71 = vector.shape_cast %68 : vector<8x8xf32> to vector<1x1x8x8xf32>
    tpu.vector_store %arg18[%c0_33, %c2, %c0_34, %c0_35], %71 {strides = array<i32>} : memref<1x4x8x8xf32, #tpu.memory_space<vmem>>, vector<1x1x8x8xf32>,
    %72 = arith.truncf %68 : vector<8x8xf32> to vector<8x8xbf16>
    %73 = vector.extract_strided_slice %8 {offsets = [0, 16], sizes = [8, 8], strides = [1, 1]} : vector<8x32xbf16> to vector<8x8xbf16>
    %cst_36 = arith.constant dense<0.000000e+00> : vector<8x8xf32>
    %74 = tpu.matmul %72, %73, %cst_36 {dimension_numbers = #tpu.dot_dimension_numbers<[1], [0], [0], [1], [0, 0, 1, 1], [], []>} : vector<8x8xbf16>, vector<8x8xbf16>, vector<8x8xf32> -> vector<8x8xf32>
    %75 = vector.extract_strided_slice %14 {offsets = [0, 24], sizes = [8, 8], strides = [1, 1]} : vector<8x32xbf16> to vector<8x8xbf16>
    %76 = vector.extract_strided_slice %6 {offsets = [0, 24], sizes = [8, 8], strides = [1, 1]} : vector<8x32xbf16> to vector<8x8xbf16>
    %77 = tpu.transpose %76, [1, 0] : vector<8x8xbf16> -> vector<8x8xbf16>
    %cst_37 = arith.constant dense<0.000000e+00> : vector<8x8xf32>
    %78 = tpu.matmul %75, %77, %cst_37 {dimension_numbers = #tpu.dot_dimension_numbers<[1], [0], [0], [1], [0, 0, 1, 1], [], []>} : vector<8x8xbf16>, vector<8x8xbf16>, vector<8x8xf32> -> vector<8x8xf32>
    %cst_38 = arith.constant dense<0xFF800000> : vector<8xf32>
    %79 = vector.multi_reduction <maximumf>, %78, %cst_38 [1] : vector<8x8xf32> to vector<8xf32>
    %80 = vector.shape_cast %79 : vector<8xf32> to vector<8x1xf32>
    %81 = vector.broadcast %80 : vector<8x1xf32> to vector<8x8xf32>
    %82 = arith.subf %78, %81 : vector<8x8xf32>
    %83 = math.exp %82 : vector<8x8xf32>
    %cst_39 = arith.constant dense<0.000000e+00> : vector<8xf32>
    %84 = vector.multi_reduction <add>, %83, %cst_39 [1] : vector<8x8xf32> to vector<8xf32>
    %85 = vector.shape_cast %84 : vector<8xf32> to vector<8x1xf32>
    %86 = tpu.reciprocal %85 {approx = true} : vector<8x1xf32> -> vector<8x1xf32>
    %87 = vector.broadcast %86 : vector<8x1xf32> to vector<8x8xf32>
    %88 = arith.mulf %83, %87 : vector<8x8xf32>
    %c0_40 = arith.constant 0 : index
    %c3 = arith.constant 3 : index
    %c0_41 = arith.constant 0 : index
    %c0_42 = arith.constant 0 : index
    %89 = vector.load %arg18[%c0_40, %c3, %c0_41, %c0_42] : memref<1x4x8x8xf32, #tpu.memory_space<vmem>>, vector<1x1x8x8xf32>
    %90 = vector.shape_cast %89 : vector<1x1x8x8xf32> to vector<8x8xf32>
    %91 = vector.shape_cast %88 : vector<8x8xf32> to vector<1x1x8x8xf32>
    tpu.vector_store %arg18[%c0_40, %c3, %c0_41, %c0_42], %91 {strides = array<i32>} : memref<1x4x8x8xf32, #tpu.memory_space<vmem>>, vector<1x1x8x8xf32>,
    %92 = arith.truncf %88 : vector<8x8xf32> to vector<8x8xbf16>
    %93 = vector.extract_strided_slice %8 {offsets = [0, 24], sizes = [8, 8], strides = [1, 1]} : vector<8x32xbf16> to vector<8x8xbf16>
    %cst_43 = arith.constant dense<0.000000e+00> : vector<8x8xf32>
    %94 = tpu.matmul %92, %93, %cst_43 {dimension_numbers = #tpu.dot_dimension_numbers<[1], [0], [0], [1], [0, 0, 1, 1], [], []>} : vector<8x8xbf16>, vector<8x8xbf16>, vector<8x8xf32> -> vector<8x8xf32>
    %95 = tpu.concatenate %34, %54, %74, %94 in 1 : vector<8x8xf32>, vector<8x8xf32>, vector<8x8xf32>, vector<8x8xf32> -> vector<8x32xf32>
    %96 = arith.truncf %95 : vector<8x32xf32> to vector<8x32xbf16>
    %c0_44 = arith.constant 0 : index
    %c0_45 = arith.constant 0 : index
    %97 = vector.load %arg7[%c0_44, %c0_45] : memref<32x32xbf16, #tpu.memory_space<vmem>>, vector<32x32xbf16>
    %cst_46 = arith.constant dense<0.000000e+00> : vector<8x32xf32>
    %98 = tpu.matmul %96, %97, %cst_46 {dimension_numbers = #tpu.dot_dimension_numbers<[1], [0], [0], [1], [0, 0, 1, 1], [], []>} : vector<8x32xbf16>, vector<32x32xbf16>, vector<8x32xf32> -> vector<8x32xf32>
    %c0_47 = arith.constant 0 : index
    %c0_48 = arith.constant 0 : index
    %99 = vector.load %arg8[%c0_47, %c0_48] : memref<1x32xf32, #tpu.memory_space<vmem>>, vector<1x32xf32>
    %100 = vector.broadcast %99 : vector<1x32xf32> to vector<8x32xf32>
    %101 = arith.addf %98, %100 : vector<8x32xf32>
    %102 = arith.addf %1, %101 : vector<8x32xf32>
    %cst_49 = arith.constant dense<0.000000e+00> : vector<8xf32>
    %103 = vector.multi_reduction <add>, %102, %cst_49 [1] : vector<8x32xf32> to vector<8xf32>
    %104 = vector.shape_cast %103 : vector<8xf32> to vector<8x1xf32>
    %cst_50 = arith.constant 3.200000e+01 : f32
    %105 = vector.broadcast %cst_50 : f32 to vector<8x1xf32>
    %106 = arith.divf %104, %105 : vector<8x1xf32>
    %107 = arith.mulf %102, %102 : vector<8x32xf32>
    %cst_51 = arith.constant dense<0.000000e+00> : vector<8xf32>
    %108 = vector.multi_reduction <add>, %107, %cst_51 [1] : vector<8x32xf32> to vector<8xf32>
    %109 = vector.shape_cast %108 : vector<8xf32> to vector<8x1xf32>
    %cst_52 = arith.constant 3.200000e+01 : f32
    %110 = vector.broadcast %cst_52 : f32 to vector<8x1xf32>
    %111 = arith.divf %109, %110 : vector<8x1xf32>
    %112 = arith.mulf %106, %106 : vector<8x1xf32>
    %113 = arith.subf %111, %112 : vector<8x1xf32>
    %cst_53 = arith.constant 0.000000e+00 : f32
    %114 = vector.broadcast %cst_53 : f32 to vector<8x1xf32>
    %115 = arith.maximumf %113, %114 : vector<8x1xf32>
    %116 = vector.broadcast %106 : vector<8x1xf32> to vector<8x32xf32>
    %117 = arith.subf %102, %116 : vector<8x32xf32>
    %cst_54 = arith.constant 9.99999974E-6 : f32
    %118 = vector.broadcast %cst_54 : f32 to vector<8x1xf32>
    %119 = arith.addf %115, %118 : vector<8x1xf32>
    %120 = math.rsqrt %119 : vector<8x1xf32>
    %121 = vector.broadcast %120 : vector<8x1xf32> to vector<8x32xf32>
    %122 = arith.mulf %117, %121 : vector<8x32xf32>
    %c0_55 = arith.constant 0 : index
    %c0_56 = arith.constant 0 : index
    %123 = vector.load %arg9[%c0_55, %c0_56] : memref<1x32xf32, #tpu.memory_space<vmem>>, vector<1x32xf32>
    %124 = vector.broadcast %123 : vector<1x32xf32> to vector<8x32xf32>
    %125 = arith.mulf %122, %124 : vector<8x32xf32>
    %c0_57 = arith.constant 0 : index
    %c0_58 = arith.constant 0 : index
    %126 = vector.load %arg10[%c0_57, %c0_58] : memref<1x32xf32, #tpu.memory_space<vmem>>, vector<1x32xf32>
    %127 = vector.broadcast %126 : vector<1x32xf32> to vector<8x32xf32>
    %128 = arith.addf %125, %127 : vector<8x32xf32>
    %129 = arith.truncf %128 : vector<8x32xf32> to vector<8x32xbf16>
    %c0_59 = arith.constant 0 : index
    %c0_60 = arith.constant 0 : index
    %130 = vector.load %arg11[%c0_59, %c0_60] : memref<32x128xbf16, #tpu.memory_space<vmem>>, vector<32x128xbf16>
    %cst_61 = arith.constant dense<0.000000e+00> : vector<8x128xf32>
    %131 = tpu.matmul %129, %130, %cst_61 {dimension_numbers = #tpu.dot_dimension_numbers<[1], [0], [0], [1], [0, 0, 1, 1], [], []>} : vector<8x32xbf16>, vector<32x128xbf16>, vector<8x128xf32> -> vector<8x128xf32>
    %c0_62 = arith.constant 0 : index
    %c0_63 = arith.constant 0 : index
    %132 = vector.load %arg12[%c0_62, %c0_63] : memref<1x128xf32, #tpu.memory_space<vmem>>, vector<1x128xf32>
    %133 = vector.broadcast %132 : vector<1x128xf32> to vector<8x128xf32>
    %134 = arith.addf %131, %133 : vector<8x128xf32>
    %cst_64 = arith.constant 0.000000e+00 : f32
    %135 = vector.broadcast %cst_64 : f32 to vector<8x128xf32>
    %136 = arith.maximumf %134, %135 : vector<8x128xf32>
    %137 = arith.truncf %136 : vector<8x128xf32> to vector<8x128xbf16>
    %c0_65 = arith.constant 0 : index
    %c0_66 = arith.constant 0 : index
    %138 = vector.load %arg13[%c0_65, %c0_66] : memref<128x32xbf16, #tpu.memory_space<vmem>>, vector<128x32xbf16>
    %cst_67 = arith.constant dense<0.000000e+00> : vector<8x32xf32>
    %139 = tpu.matmul %137, %138, %cst_67 {dimension_numbers = #tpu.dot_dimension_numbers<[1], [0], [0], [1], [0, 0, 1, 1], [], []>} : vector<8x128xbf16>, vector<128x32xbf16>, vector<8x32xf32> -> vector<8x32xf32>
    %c0_68 = arith.constant 0 : index
    %c0_69 = arith.constant 0 : index
    %140 = vector.load %arg14[%c0_68, %c0_69] : memref<1x32xf32, #tpu.memory_space<vmem>>, vector<1x32xf32>
    %141 = vector.broadcast %140 : vector<1x32xf32> to vector<8x32xf32>
    %142 = arith.addf %139, %141 : vector<8x32xf32>
    %143 = arith.addf %128, %142 : vector<8x32xf32>
    %cst_70 = arith.constant dense<0.000000e+00> : vector<8xf32>
    %144 = vector.multi_reduction <add>, %143, %cst_70 [1] : vector<8x32xf32> to vector<8xf32>
    %145 = vector.shape_cast %144 : vector<8xf32> to vector<8x1xf32>
    %cst_71 = arith.constant 3.200000e+01 : f32
    %146 = vector.broadcast %cst_71 : f32 to vector<8x1xf32>
    %147 = arith.divf %145, %146 : vector<8x1xf32>
    %148 = arith.mulf %143, %143 : vector<8x32xf32>
    %cst_72 = arith.constant dense<0.000000e+00> : vector<8xf32>
    %149 = vector.multi_reduction <add>, %148, %cst_72 [1] : vector<8x32xf32> to vector<8xf32>
    %150 = vector.shape_cast %149 : vector<8xf32> to vector<8x1xf32>
    %cst_73 = arith.constant 3.200000e+01 : f32
    %151 = vector.broadcast %cst_73 : f32 to vector<8x1xf32>
    %152 = arith.divf %150, %151 : vector<8x1xf32>
    %153 = arith.mulf %147, %147 : vector<8x1xf32>
    %154 = arith.subf %152, %153 : vector<8x1xf32>
    %cst_74 = arith.constant 0.000000e+00 : f32
    %155 = vector.broadcast %cst_74 : f32 to vector<8x1xf32>
    %156 = arith.maximumf %154, %155 : vector<8x1xf32>
    %157 = vector.broadcast %147 : vector<8x1xf32> to vector<8x32xf32>
    %158 = arith.subf %143, %157 : vector<8x32xf32>
    %cst_75 = arith.constant 9.99999974E-6 : f32
    %159 = vector.broadcast %cst_75 : f32 to vector<8x1xf32>
    %160 = arith.addf %156, %159 : vector<8x1xf32>
    %161 = math.rsqrt %160 : vector<8x1xf32>
    %162 = vector.broadcast %161 : vector<8x1xf32> to vector<8x32xf32>
    %163 = arith.mulf %158, %162 : vector<8x32xf32>
    %c0_76 = arith.constant 0 : index
    %c0_77 = arith.constant 0 : index
    %164 = vector.load %arg15[%c0_76, %c0_77] : memref<1x32xf32, #tpu.memory_space<vmem>>, vector<1x32xf32>
    %165 = vector.broadcast %164 : vector<1x32xf32> to vector<8x32xf32>
    %166 = arith.mulf %163, %165 : vector<8x32xf32>
    %c0_78 = arith.constant 0 : index
    %c0_79 = arith.constant 0 : index
    %167 = vector.load %arg16[%c0_78, %c0_79] : memref<1x32xf32, #tpu.memory_space<vmem>>, vector<1x32xf32>
    %168 = vector.broadcast %167 : vector<1x32xf32> to vector<8x32xf32>
    %169 = arith.addf %166, %168 : vector<8x32xf32>
    %c0_80 = arith.constant 0 : index
    %c0_81 = arith.constant 0 : index
    %c0_82 = arith.constant 0 : index
    %170 = vector.load %arg17[%c0_80, %c0_81, %c0_82] : memref<1x8x32xf32, #tpu.memory_space<vmem>>, vector<1x8x32xf32>
    %171 = vector.shape_cast %170 : vector<1x8x32xf32> to vector<8x32xf32>
    %172 = vector.shape_cast %169 : vector<8x32xf32> to vector<1x8x32xf32>
    tpu.vector_store %arg17[%c0_80, %c0_81, %c0_82], %172 {strides = array<i32>} : memref<1x8x32xf32, #tpu.memory_space<vmem>>, vector<1x8x32xf32>,
    return
  }
  func.func @transform_0(%arg0: i32, %arg1: i32) -> (i32, i32, i32) {
    %c0_i32 = arith.constant 0 : i32
    %c0_i32_0 = arith.constant 0 : i32
    return %arg0, %arg1, %c0_i32 : i32, i32, i32
  }
  func.func @transform_1(%arg0: i32, %arg1: i32) -> (i32, i32, i32) {
    %c0_i32 = arith.constant 0 : i32
    %c0_i32_0 = arith.constant 0 : i32
    %c0_i32_1 = arith.constant 0 : i32
    return %arg0, %c0_i32, %c0_i32_0 : i32, i32, i32
  }
  func.func @transform_2(%arg0: i32, %arg1: i32) -> (i32, i32, i32) {
    %c0_i32 = arith.constant 0 : i32
    %c0_i32_0 = arith.constant 0 : i32
    %c0_i32_1 = arith.constant 0 : i32
    return %arg0, %c0_i32, %c0_i32_0 : i32, i32, i32
  }
  func.func @transform_3(%arg0: i32, %arg1: i32) -> (i32, i32) {
    %c0_i32 = arith.constant 0 : i32
    %c0_i32_0 = arith.constant 0 : i32
    %c0_i32_1 = arith.constant 0 : i32
    return %c0_i32, %c0_i32_0 : i32, i32
  }
  func.func @transform_4(%arg0: i32, %arg1: i32) -> (i32, i32) {
    %c0_i32 = arith.constant 0 : i32
    %c0_i32_0 = arith.constant 0 : i32
    %c0_i32_1 = arith.constant 0 : i32
    return %c0_i32, %c0_i32_0 : i32, i32
  }
  func.func @transform_5(%arg0: i32, %arg1: i32) -> (i32, i32) {
    %c0_i32 = arith.constant 0 : i32
    %c0_i32_0 = arith.constant 0 : i32
    %c0_i32_1 = arith.constant 0 : i32
    return %c0_i32, %c0_i32_0 : i32, i32
  }
  func.func @transform_6(%arg0: i32, %arg1: i32) -> (i32, i32) {
    %c0_i32 = arith.constant 0 : i32
    %c0_i32_0 = arith.constant 0 : i32
    %c0_i32_1 = arith.constant 0 : i32
    return %c0_i32, %c0_i32_0 : i32, i32
  }
  func.func @transform_7(%arg0: i32, %arg1: i32) -> (i32, i32) {
    %c0_i32 = arith.constant 0 : i32
    %c0_i32_0 = arith.constant 0 : i32
    %c0_i32_1 = arith.constant 0 : i32
    return %c0_i32, %c0_i32_0 : i32, i32
  }
  func.func @transform_8(%arg0: i32, %arg1: i32) -> (i32, i32) {
    %c0_i32 = arith.constant 0 : i32
    %c0_i32_0 = arith.constant 0 : i32
    %c0_i32_1 = arith.constant 0 : i32
    return %c0_i32, %c0_i32_0 : i32, i32
  }
  func.func @transform_9(%arg0: i32, %arg1: i32) -> (i32, i32) {
    %c0_i32 = arith.constant 0 : i32
    %c0_i32_0 = arith.constant 0 : i32
    %c0_i32_1 = arith.constant 0 : i32
    return %c0_i32, %c0_i32_0 : i32, i32
  }
  func.func @transform_10(%arg0: i32, %arg1: i32) -> (i32, i32) {
    %c0_i32 = arith.constant 0 : i32
    %c0_i32_0 = arith.constant 0 : i32
    %c0_i32_1 = arith.constant 0 : i32
    return %c0_i32, %c0_i32_0 : i32, i32
  }
  func.func @transform_11(%arg0: i32, %arg1: i32) -> (i32, i32) {
    %c0_i32 = arith.constant 0 : i32
    %c0_i32_0 = arith.constant 0 : i32
    %c0_i32_1 = arith.constant 0 : i32
    return %c0_i32, %c0_i32_0 : i32, i32
  }
  func.func @transform_12(%arg0: i32, %arg1: i32) -> (i32, i32) {
    %c0_i32 = arith.constant 0 : i32
    %c0_i32_0 = arith.constant 0 : i32
    %c0_i32_1 = arith.constant 0 : i32
    return %c0_i32, %c0_i32_0 : i32, i32
  }
  func.func @transform_13(%arg0: i32, %arg1: i32) -> (i32, i32) {
    %c0_i32 = arith.constant 0 : i32
    %c0_i32_0 = arith.constant 0 : i32
    %c0_i32_1 = arith.constant 0 : i32
    return %c0_i32, %c0_i32_0 : i32, i32
  }
  func.func @transform_14(%arg0: i32, %arg1: i32) -> (i32, i32) {
    %c0_i32 = arith.constant 0 : i32
    %c0_i32_0 = arith.constant 0 : i32
    %c0_i32_1 = arith.constant 0 : i32
    return %c0_i32, %c0_i32_0 : i32, i32
  }
  func.func @transform_15(%arg0: i32, %arg1: i32) -> (i32, i32, i32) {
    %c0_i32 = arith.constant 0 : i32
    %c0_i32_0 = arith.constant 0 : i32
    return %arg0, %arg1, %c0_i32 : i32, i32, i32
  }
  func.func @transform_16(%arg0: i32, %arg1: i32) -> (i32, i32, i32, i32) {
    %c0_i32 = arith.constant 0 : i32
    %c0_i32_0 = arith.constant 0 : i32
    %c0_i32_1 = arith.constant 0 : i32
    return %arg0, %c0_i32, %arg1, %c0_i32_0 : i32, i32, i32, i32
  }
}

</mosaic_0001>

<llo_original>
// kernel: encoder_layer.2
$region0: #{encoder_layer.2}
  #allocation0 [shape = 'u32[]', space=smem, size = 0x4, offset = 0x4, fixed_abs, tag = 'smem constant byte address 0x4 - core index']
  #allocation1 [shape = 'u32[144,128]{1,0:T(1,128)}', space=vmem, size = 0x12000, scoped, tag = 'internal scratch']
  %s0 = inlined_call_operand.vmem [shape: f32[2,8,32], index: 0, kind: input, shape index: {}]
  %s1 = inlined_call_operand.vmem [shape: bf16[32,64], index: 1, kind: input, shape index: {}]
  %s2 = inlined_call_operand.vmem [shape: f32[1,64], index: 2, kind: input, shape index: {}]
  %s3 = inlined_call_operand.vmem [shape: bf16[2,8,32], index: 3, kind: output, shape index: {0}]
  %s4 = inlined_call_operand.vmem [shape: bf16[2,8,32], index: 4, kind: output, shape index: {1}]
  %5 = xla_tuple %s3, %s4
  %s6 = sld [smem:[#allocation0]]
  $region53: #{encoder_layer.2} parent=0
    _
  %s8 = ssub.s32 1, %s6
  %s9 = scalar_select 0, %s8, %s6
  loop: start=0, step=1, limit=4
  $region2: #{encoder_layer.2} parent=0 // loop_pre_header
    _
  $region3: #{encoder_layer.2} parent=0 // loop_header
    %s11 = sphi 0, %s15
    %p12 = scmp.ge.s32.totalorder %s11, 4
    %s18 = sphi 0, %s30
    %s19 = sphi 0, %s26
    %s20 = sphi 0, %s18
    %s21 = sphi 0, %s19
    %s22 = sphi 0, %s20
    %s23 = sphi 0, %s21
    %s35 = sphi 0, %s37
    %s38 = sphi 0, %s35
    %s39 = sphi 0, %s38
    %s55 = sphi 0, %s39
    %s59 = sphi 0, %s59
    %s61 = sphi 0, %s59
    %s62 = sphi 0, %s61
    %s76 = sphi 0, %s62
    %s80 = sphi 0, %s80
    %s82 = sphi 0, %s80
    %s83 = sphi 0, %s82
    %s97 = sphi 0, %s83
    %s105 = sphi 0, %s107
    %s108 = sphi 0, %s105
    %s109 = sphi 0, %s108
    %s125 = sphi 0, %s109
    %s133 = sphi 0, %s135
    %s136 = sphi 0, %s133
    %s137 = sphi 0, %s136
    %s153 = sphi 0, %s137
  $region4: #{encoder_layer.2} parent=0 // loop_header_branch
    %14 = sbr.rel (%p12) target = $region8
  $region5: #{encoder_layer.2} parent=0 // loop_body
    %s16 = ssub.s32 %s11, 1
    %s17 = ssub.s32 %s11, 2
    %s24 = sadd.s32 1, %s19
    %p25 = scmp.ge.s32.totalorder %s24, 1
    %s26 = scalar_select %p25, 0, %s24
    %s27 = sadd.s32 1, %s18
    %s28 = scalar_select %p25, %s27, %s18
    %p29 = scmp.ge.s32.totalorder %s28, 2
    %s30 = scalar_select %p29, 0, %s28
    %s31 = ssub.s32 %s18, %s30
    %s32 = ssub.s32 %s19, %s26
    %s33 = sor.u32 %s31, %s32
    %p34 = scmp.eq.s32.totalorder %s33, 0
    %s36 = sadd.s32 %s35, 1
    %s37 = scalar_select %p34, %s35, %s36
    %p40 = pneg %p34
    %p41 = scmp.eq.s32.totalorder %s11, 1
    %p42 = por %p40, %p41
    %p43 = scmp.ne.s32.totalorder %s35, %s38
    %p44 = scmp.eq.s32.totalorder %s11, 0
    %p45 = por %p43, %p44
    %p46 = scmp.ne.s32.totalorder %s35, %s38
    %p47 = scmp.eq.s32.totalorder %s16, 1
    %p48 = por %p46, %p47
    %p49 = scmp.ne.s32.totalorder %s38, %s39
    %p50 = scmp.eq.s32.totalorder %s16, 0
    %p51 = por %p49, %p50
    %p52 = scmp.ne.s32.totalorder %s38, %s39
    %p53 = scmp.eq.s32.totalorder %s17, 1
    %p54 = por %p52, %p53
    %p56 = scmp.ne.s32.totalorder %s39, %s55
    %p57 = scmp.eq.s32.totalorder %s17, 0
    %p58 = por %p56, %p57
    %s60 = sadd.s32 %s59, 1
    %p63 = scmp.eq.s32.totalorder %s11, 1
    %p64 = scmp.ne.s32.totalorder %s59, %s61
    %p65 = scmp.eq.s32.totalorder %s11, 0
    %p66 = por %p64, %p65
    %p67 = scmp.ne.s32.totalorder %s59, %s61
    %p68 = scmp.eq.s32.totalorder %s16, 1
    %p69 = por %p67, %p68
    %p70 = scmp.ne.s32.totalorder %s61, %s62
    %p71 = scmp.eq.s32.totalorder %s16, 0
    %p72 = por %p70, %p71
    %p73 = scmp.ne.s32.totalorder %s61, %s62
    %p74 = scmp.eq.s32.totalorder %s17, 1
    %p75 = por %p73, %p74
    %p77 = scmp.ne.s32.totalorder %s62, %s76
    %p78 = scmp.eq.s32.totalorder %s17, 0
    %p79 = por %p77, %p78
    %s81 = sadd.s32 %s80, 1
    %p84 = scmp.eq.s32.totalorder %s11, 1
    %p85 = scmp.ne.s32.totalorder %s80, %s82
    %p86 = scmp.eq.s32.totalorder %s11, 0
    %p87 = por %p85, %p86
    %p88 = scmp.ne.s32.totalorder %s80, %s82
    %p89 = scmp.eq.s32.totalorder %s16, 1
    %p90 = por %p88, %p89
    %p91 = scmp.ne.s32.totalorder %s82, %s83
    %p92 = scmp.eq.s32.totalorder %s16, 0
    %p93 = por %p91, %p92
    %p94 = scmp.ne.s32.totalorder %s82, %s83
    %p95 = scmp.eq.s32.totalorder %s17, 1
    %p96 = por %p94, %p95
    %p98 = scmp.ne.s32.totalorder %s83, %s97
    %p99 = scmp.eq.s32.totalorder %s17, 0
    %p100 = por %p98, %p99
    %s101 = ssub.s32 %s18, %s30
    %s102 = ssub.s32 %s19, %s26
    %s103 = sor.u32 %s101, %s102
    %p104 = scmp.eq.s32.totalorder %s103, 0
    %s106 = sadd.s32 %s105, 1
    %s107 = scalar_select %p104, %s105, %s106
    %p110 = pneg %p104
    %p111 = scmp.eq.s32.totalorder %s11, 1
    %p112 = por %p110, %p111
    %p113 = scmp.ne.s32.totalorder %s105, %s108
    %p114 = scmp.eq.s32.totalorder %s11, 0
    %p115 = por %p113, %p114
    %p116 = scmp.ne.s32.totalorder %s105, %s108
    %p117 = scmp.eq.s32.totalorder %s16, 1
    %p118 = por %p116, %p117
    %p119 = scmp.ne.s32.totalorder %s108, %s109
    %p120 = scmp.eq.s32.totalorder %s16, 0
    %p121 = por %p119, %p120
    %p122 = scmp.ne.s32.totalorder %s108, %s109
    %p123 = scmp.eq.s32.totalorder %s17, 1
    %p124 = por %p122, %p123
    %p126 = scmp.ne.s32.totalorder %s109, %s125
    %p127 = scmp.eq.s32.totalorder %s17, 0
    %p128 = por %p126, %p127
    %s129 = ssub.s32 %s18, %s30
    %s130 = ssub.s32 %s19, %s26
    %s131 = sor.u32 %s129, %s130
    %p132 = scmp.eq.s32.totalorder %s131, 0
    %s134 = sadd.s32 %s133, 1
    %s135 = scalar_select %p132, %s133, %s134
    %p138 = pneg %p132
    %p139 = scmp.eq.s32.totalorder %s11, 1
    %p140 = por %p138, %p139
    %p141 = scmp.ne.s32.totalorder %s133, %s136
    %p142 = scmp.eq.s32.totalorder %s11, 0
    %p143 = por %p141, %p142
    %p144 = scmp.ne.s32.totalorder %s133, %s136
    %p145 = scmp.eq.s32.totalorder %s16, 1
    %p146 = por %p144, %p145
    %p147 = scmp.ne.s32.totalorder %s136, %s137
    %p148 = scmp.eq.s32.totalorder %s16, 0
    %p149 = por %p147, %p148
    %p150 = scmp.ne.s32.totalorder %s136, %s137
    %p151 = scmp.eq.s32.totalorder %s17, 1
    %p152 = por %p150, %p151
    %p154 = scmp.ne.s32.totalorder %s137, %s153
    %p155 = scmp.eq.s32.totalorder %s17, 0
    %p156 = por %p154, %p155
    %p157 = scmp.le.s32.totalorder 1, %s11
    %p158 = scmp.lt.s32.totalorder %s11, 3
    %p159 = pnand %p157, %p158
    %p160 = pneg %p159
    // Predicated region
    $region9: #{encoder_layer.2} parent=5 // pred_check
      _
    $region10: #{encoder_layer.2} parent=5 // pred_check_branch
      %162 = sbr.rel (%p159) target = $region12
    $region11: #{encoder_layer.2} parent=5 // pred_region
      %s163 = ssub.s32 %s11, 1
      // Predicated region
      $region13: #{encoder_layer.2} parent=11 // pred_check
        %p164 = pneg %p72
      $region14: #{encoder_layer.2} parent=11 // pred_check_branch
        %166 = sbr.rel (%p164) target = $region16
      $region15: #{encoder_layer.2} parent=11 // pred_region
        _
      $region16: #{encoder_layer.2} parent=11 // pred_fallthru
        _
      // Predicated region
      $region17: #{encoder_layer.2} parent=11 // pred_check
        %p167 = pneg %p93
      $region18: #{encoder_layer.2} parent=11 // pred_check_branch
        %169 = sbr.rel (%p167) target = $region20
      $region19: #{encoder_layer.2} parent=11 // pred_region
        _
      $region20: #{encoder_layer.2} parent=11 // pred_fallthru
        _
    $region12: #{encoder_layer.2} parent=5 // pred_fallthru
      _
    %p170 = scmp.lt.s32.totalorder %s11, 2
    // Predicated region
    $region21: #{encoder_layer.2} parent=5 // pred_check
      %p171 = pneg %p170
    $region22: #{encoder_layer.2} parent=5 // pred_check_branch
      %173 = sbr.rel (%p171) target = $region24
    $region23: #{encoder_layer.2} parent=5 // pred_region
      // Predicated region
      $region25: #{encoder_layer.2} parent=23 // pred_check
        %p174 = pneg %p45
      $region26: #{encoder_layer.2} parent=23 // pred_check_branch
        %176 = sbr.rel (%p174) target = $region28
      $region27: #{encoder_layer.2} parent=23 // pred_region
        %p177 = scmp.lt.s32.totalorder %s18, 1
        %s178 = scalar_select %p177, %s18, 1
        %p179 = scmp.lt.s32.totalorder %s19, 0
        %s180 = scalar_select %p179, %s19, 0
        %s181 = sadd.s32 %s180, %s178
        %s182 = smul.addr %s181, 8
        %s183 = scalar_lea.vmem %s0, %s182
      $region28: #{encoder_layer.2} parent=23 // pred_fallthru
        _
    $region24: #{encoder_layer.2} parent=5 // pred_fallthru
      _
    %p184 = scmp.le.s32.totalorder 1, %s11
    %p185 = scmp.lt.s32.totalorder %s11, 3
    %p186 = pnand %p184, %p185
    %p187 = pneg %p186
    // Predicated region
    $region29: #{encoder_layer.2} parent=5 // pred_check
      _
    $region30: #{encoder_layer.2} parent=5 // pred_check_branch
      %189 = sbr.rel (%p186) target = $region32
    $region31: #{encoder_layer.2} parent=5 // pred_region
      %s190 = ssub.s32 %s11, 1
      %p191 = scmp.lt.s32.totalorder %s20, 1
      %s192 = scalar_select %p191, %s20, 1
      %p193 = scmp.lt.s32.totalorder %s21, 0
      %s194 = scalar_select %p193, %s21, 0
      %s195 = sadd.s32 %s194, %s192
      %s196 = smul.addr %s195, 8
      %s197 = scalar_lea.vmem %s0, %s196
      %p198 = pneg %p51
      %p199 = pneg %p48
      %p200 = pneg %p72
      %p201 = pneg %p69
      %p202 = pneg %p93
      %p203 = pneg %p90
      %p204 = pneg %p121
      %p205 = pneg %p118
      %p206 = scmp.lt.s32.totalorder %s20, 1
      %s207 = scalar_select %p206, %s20, 1
      %p208 = scmp.lt.s32.totalorder %s21, 0
      %s209 = scalar_select %p208, %s21, 0
      %s210 = sadd.s32 %s209, %s207
      %s211 = smul.addr %s210, 4
      %s212 = scalar_lea.vmem %s3, %s211
      %p213 = pneg %p149
      %p214 = pneg %p146
      %p215 = scmp.lt.s32.totalorder %s20, 1
      %s216 = scalar_select %p215, %s20, 1
      %p217 = scmp.lt.s32.totalorder %s21, 0
      %s218 = scalar_select %p217, %s21, 0
      %s219 = sadd.s32 %s218, %s216
      %s220 = smul.addr %s219, 4
      %s221 = scalar_lea.vmem %s4, %s220
      %p222 = scmp.lt.s32.totalorder %s20, 1
      %s223 = scalar_select %p222, %s20, 1
      %p224 = scmp.lt.s32.totalorder %s21, 0
      %s225 = scalar_select %p224, %s21, 0
      %s226 = sadd.s32 %s225, %s223
      %s227 = smul.addr %s226, 8
      %s228 = scalar_lea.vmem %s0, %s227
      %p229 = scmp.lt.s32.totalorder %s20, 1
      %s230 = scalar_select %p229, %s20, 1
      %p231 = scmp.lt.s32.totalorder %s21, 0
      %s232 = scalar_select %p231, %s21, 0
      %s233 = sadd.s32 %s232, %s230
      %s234 = smul.addr %s233, 4
      %s235 = scalar_lea.vmem %s3, %s234
      %p236 = scmp.lt.s32.totalorder %s20, 1
      %s237 = scalar_select %p236, %s20, 1
      %p238 = scmp.lt.s32.totalorder %s21, 0
      %s239 = scalar_select %p238, %s21, 0
      %s240 = sadd.s32 %s239, %s237
      %s241 = smul.addr %s240, 4
      %s242 = scalar_lea.vmem %s4, %s241
      %v244 = vld [vmem:[%s228] sm:$0xff]
      %v245 = vpack.c.bf16 %v244, %v244
      %v246 = vld [vmem:[%s1] sm:$0xf]
      %v247 = vld [vmem:[%s1 + $0x4] sm:$0xf]
      %v248 = vld [vmem:[%s1 + $0x8] sm:$0xf]
      %v249 = vld [vmem:[%s1 + $0xc] sm:$0xf]
      %v250 = vld [vmem:[%s2] sm:$0x1]
      %v252 = vlaneseq
      %v253 = vshrl.u32 %v252, 7
      %v254 = vsub.s32 0, %v253
      %v255 = vrot.slane %v250, %v254
      %v261 = vunpack.c.l.b16 %v246
      %v262 = vunpack.c.l.b16 %v247
      %v263 = vunpack.c.l.b16 %v248
      %v264 = vunpack.c.l.b16 %v249
      %v265 = vpack.c.b16 %v262, %v261
      %v266 = vpack.c.b16 %v264, %v263
      %vm269 = vcmask 261120
      %v271 = vsel %vm269, %v245, 0
      %273 = vmatprep.subr.bf16.mxu0 0
      %274 = vmatpush1.bf16.msra.mxu0 %v265
      %275 = vmatprep.subr.bf16.mxu0 0
      %276 = vmatpush1.bf16.msra.mxu0 %v266
      %277 = vmatprep.subr.bf16.mxu0 0
      %278 = vmatpush1.bf16.msra.mxu0 0
      %279 = vmatprep.subr.bf16.mxu0 0
      %280 = vmatpush1.bf16.msra.mxu0 0
      %281 = vmatprep.subr.bf16.mxu0 0
      %282 = vmatpush1.bf16.msra.mxu0 0
      %283 = vmatprep.subr.bf16.mxu0 0
      %284 = vmatpush1.bf16.msra.mxu0 0
      %285 = vmatprep.subr.bf16.mxu0 0
      %286 = vmatpush1.bf16.msra.mxu0 0
      %287 = vmatprep.subr.bf16.mxu0 0
      %288 = vmatpush1.bf16.msra.mxu0 0
      %289 = vmatprep.subr.bf16.mxu0 0
      %290 = vmatpush1.bf16.msra.mxu0 0
      %291 = vmatprep.subr.bf16.mxu0 0
      %292 = vmatpush1.bf16.msra.mxu0 0
      %293 = vmatprep.subr.bf16.mxu0 0
      %294 = vmatpush1.bf16.msra.mxu0 0
      %295 = vmatprep.subr.bf16.mxu0 0
      %296 = vmatpush1.bf16.msra.mxu0 0
      %297 = vmatprep.subr.bf16.mxu0 0
      %298 = vmatpush1.bf16.msra.mxu0 0
      %299 = vmatprep.subr.bf16.mxu0 0
      %300 = vmatpush1.bf16.msra.mxu0 0
      %301 = vmatprep.subr.bf16.mxu0 0
      %302 = vmatpush1.bf16.msra.mxu0 0
      %303 = vmatprep.subr.bf16.mxu0 0
      %304 = vmatpush1.bf16.msra.mxu0 0
      %305 = vmatprep.mubr.bf16.mxu0 0
      %306 = vmatmul.mubr.bf16.gmra.mrb[0].mxu0 %v271
      %v307 = vpop.f32.mrb[0].mxu0
      %v308 = vadd.f32 %v255, %v307
      %v309 = vpop.f32.mrb[0].mxu0
      %v310 = vpop.f32.mrb[0].mxu0
      %v311 = vpop.f32.mrb[0].mxu0
      %312 = vdwg.mxu0
      %v313 = vpack.c.bf16 %v308, %v308
      %vm314 = vcmask 257024
      %315 = vst.msk [vmem:[%s235] sm:$0xf] %vm314, %v313
      %v317 = vunpack.c.l.b16 %v313
      %v318 = vpack.c.b16 %v317, %v317
      %319 = vrot.lane.b32.xlu0 %v318, 96
      %v320 = vpop.permute.xlu0 %319
      %322 = vst.msk [vmem:[%s242] sm:$0xf] %vm314, %v320
      %p323 = scmp.lt.s32.totalorder %s20, 1
      %s324 = scalar_select %p323, %s20, 1
      %p325 = scmp.lt.s32.totalorder %s21, 0
      %s326 = scalar_select %p325, %s21, 0
      %s327 = sadd.s32 %s326, %s324
      %s328 = smul.addr %s327, 4
      %s329 = scalar_lea.vmem %s3, %s328
      %p330 = scmp.lt.s32.totalorder %s20, 1
      %s331 = scalar_select %p330, %s20, 1
      %p332 = scmp.lt.s32.totalorder %s21, 0
      %s333 = scalar_select %p332, %s21, 0
      %s334 = sadd.s32 %s333, %s331
      %s335 = smul.addr %s334, 4
      %s336 = scalar_lea.vmem %s4, %s335
      // Predicated region
      $region33: #{encoder_layer.2} parent=31 // pred_check
        %p337 = pneg %p118
      $region34: #{encoder_layer.2} parent=31 // pred_check_branch
        %339 = sbr.rel (%p337) target = $region36
      $region35: #{encoder_layer.2} parent=31 // pred_region
        _
      $region36: #{encoder_layer.2} parent=31 // pred_fallthru
        _
      // Predicated region
      $region37: #{encoder_layer.2} parent=31 // pred_check
        %p340 = pneg %p146
      $region38: #{encoder_layer.2} parent=31 // pred_check_branch
        %342 = sbr.rel (%p340) target = $region40
      $region39: #{encoder_layer.2} parent=31 // pred_region
        _
      $region40: #{encoder_layer.2} parent=31 // pred_fallthru
        _
    $region32: #{encoder_layer.2} parent=5 // pred_fallthru
      _
    %p343 = scmp.le.s32.totalorder 2, %s11
    // Predicated region
    $region41: #{encoder_layer.2} parent=5 // pred_check
      %p344 = pneg %p343
    $region42: #{encoder_layer.2} parent=5 // pred_check_branch
      %346 = sbr.rel (%p344) target = $region44
    $region43: #{encoder_layer.2} parent=5 // pred_region
      %s347 = ssub.s32 %s11, 2
      // Predicated region
      $region45: #{encoder_layer.2} parent=43 // pred_check
        %p348 = pneg %p124
      $region46: #{encoder_layer.2} parent=43 // pred_check_branch
        %350 = sbr.rel (%p348) target = $region48
      $region47: #{encoder_layer.2} parent=43 // pred_region
        %p351 = scmp.lt.s32.totalorder %s22, 1
        %s352 = scalar_select %p351, %s22, 1
        %p353 = scmp.lt.s32.totalorder %s23, 0
        %s354 = scalar_select %p353, %s23, 0
        %s355 = sadd.s32 %s354, %s352
        %s356 = smul.addr %s355, 4
        %s357 = scalar_lea.vmem %s3, %s356
      $region48: #{encoder_layer.2} parent=43 // pred_fallthru
        _
      // Predicated region
      $region49: #{encoder_layer.2} parent=43 // pred_check
        %p358 = pneg %p152
      $region50: #{encoder_layer.2} parent=43 // pred_check_branch
        %360 = sbr.rel (%p358) target = $region52
      $region51: #{encoder_layer.2} parent=43 // pred_region
        %p361 = scmp.lt.s32.totalorder %s22, 1
        %s362 = scalar_select %p361, %s22, 1
        %p363 = scmp.lt.s32.totalorder %s23, 0
        %s364 = scalar_select %p363, %s23, 0
        %s365 = sadd.s32 %s364, %s362
        %s366 = smul.addr %s365, 4
        %s367 = scalar_lea.vmem %s4, %s366
      $region52: #{encoder_layer.2} parent=43 // pred_fallthru
        _
    $region44: #{encoder_layer.2} parent=5 // pred_fallthru
      _
  $region6: #{encoder_layer.2} parent=0 // loop_footer
    %s15 = sadd.s32 1, %s11
  $region7: #{encoder_layer.2} parent=0 // loop_footer_branch
    %10 = sbr.rel target = $region3
  $region8: #{encoder_layer.2} parent=0 // loop_exit
    _

// kernel: encoder_layer.3
$region0: #{encoder_layer.3}
  #allocation0 [shape = 'u32[]', space=smem, size = 0x4, offset = 0x4, fixed_abs, tag = 'smem constant byte address 0x4 - core index']
  #allocation1 [shape = 'u32[144,128]{1,0:T(1,128)}', space=vmem, size = 0x12000, scoped, tag = 'internal scratch']
  %s0 = inlined_call_operand.vmem [shape: f32[2,8,32], index: 0, kind: input, shape index: {}]
  %s1 = inlined_call_operand.vmem [shape: bf16[2,8,32], index: 1, kind: input, shape index: {}]
  %s2 = inlined_call_operand.vmem [shape: bf16[2,8,32], index: 2, kind: input, shape index: {}]
  %s3 = inlined_call_operand.vmem [shape: bf16[32,32], index: 3, kind: input, shape index: {}]
  %s4 = inlined_call_operand.vmem [shape: f32[1,32], index: 4, kind: input, shape index: {}]
  %s5 = inlined_call_operand.vmem [shape: bf16[32,32], index: 5, kind: input, shape index: {}]
  %s6 = inlined_call_operand.vmem [shape: f32[1,32], index: 6, kind: input, shape index: {}]
  %s7 = inlined_call_operand.vmem [shape: f32[1,32], index: 7, kind: input, shape index: {}]
  %s8 = inlined_call_operand.vmem [shape: f32[1,32], index: 8, kind: input, shape index: {}]
  %s9 = inlined_call_operand.vmem [shape: bf16[32,128], index: 9, kind: input, shape index: {}]
  %s10 = inlined_call_operand.vmem [shape: f32[1,128], index: 10, kind: input, shape index: {}]
  %s11 = inlined_call_operand.vmem [shape: bf16[128,32], index: 11, kind: input, shape index: {}]
  %s12 = inlined_call_operand.vmem [shape: f32[1,32], index: 12, kind: input, shape index: {}]
  %s13 = inlined_call_operand.vmem [shape: f32[1,32], index: 13, kind: input, shape index: {}]
  %s14 = inlined_call_operand.vmem [shape: f32[1,32], index: 14, kind: input, shape index: {}]
  %s15 = inlined_call_operand.hbm [shape: f32[2,8,32], index: 15, kind: output, shape index: {0}]
  %s16 = inlined_call_operand.hbm [shape: f32[2,4,8,8], index: 16, kind: output, shape index: {1}]
  %17 = xla_tuple %s15, %s16
  %s18 = sld [smem:[#allocation0]]
  $region101: #{encoder_layer.3} parent=0
    _
  %s20 = ssub.s32 1, %s18
  %s21 = scalar_select 0, %s20, %s18
  $region1: #{encoder_layer.3} parent=0
    #allocation2 [shape = 'u8[8192]{0}', space=vmem, size = 0x2000, scoped, tag = 'output window, operand 0']
    #allocation3 [shape = 's32[2]{0}', space=sflag, size = 0x8, scoped, tag = 'scoped memory for encoder_layer.3']
    #allocation4 [shape = 'u8[32768]{0}', space=vmem, size = 0x8000, scoped, tag = 'output window, operand 1']
    #allocation5 [shape = 's32[2]{0}', space=sflag, size = 0x8, scoped, tag = 'scoped memory for encoder_layer.3']
    %22 = vsyncpa [#allocation3], 0
    %s23 = scalar_lea.sflag [#allocation3], 1
    %24 = vsyncpa %s23, 0
    %25 = vsyncpa [#allocation5], 0
    %s26 = scalar_lea.sflag [#allocation5], 1
    %27 = vsyncpa %s26, 0
    loop: start=0, step=1, limit=4
    $region2: #{encoder_layer.3} parent=1 // loop_pre_header
      _
    $region3: #{encoder_layer.3} parent=1 // loop_header
      %s29 = sphi 0, %s33
      %p30 = scmp.ge.s32.totalorder %s29, 4
      %s36 = sphi 0, %s48
      %s37 = sphi 0, %s44
      %s38 = sphi 0, %s36
      %s39 = sphi 0, %s37
      %s40 = sphi 0, %s38
      %s41 = sphi 0, %s39
      %s53 = sphi 0, %s55
      %s56 = sphi 0, %s53
      %s57 = sphi 0, %s56
      %s73 = sphi 0, %s57
      %s79 = sphi 0, %s81
      %s82 = sphi 0, %s79
      %s83 = sphi 0, %s82
      %s99 = sphi 0, %s83
      %s105 = sphi 0, %s107
      %s108 = sphi 0, %s105
      %s109 = sphi 0, %s108
      %s125 = sphi 0, %s109
      %s129 = sphi 0, %s129
      %s131 = sphi 0, %s129
      %s132 = sphi 0, %s131
      %s146 = sphi 0, %s132
      %s150 = sphi 0, %s150
      %s152 = sphi 0, %s150
      %s153 = sphi 0, %s152
      %s167 = sphi 0, %s153
      %s171 = sphi 0, %s171
      %s173 = sphi 0, %s171
      %s174 = sphi 0, %s173
      %s188 = sphi 0, %s174
      %s192 = sphi 0, %s192
      %s194 = sphi 0, %s192
      %s195 = sphi 0, %s194
      %s209 = sphi 0, %s195
      %s213 = sphi 0, %s213
      %s215 = sphi 0, %s213
      %s216 = sphi 0, %s215
      %s230 = sphi 0, %s216
      %s234 = sphi 0, %s234
      %s236 = sphi 0, %s234
      %s237 = sphi 0, %s236
      %s251 = sphi 0, %s237
      %s255 = sphi 0, %s255
      %s257 = sphi 0, %s255
      %s258 = sphi 0, %s257
      %s272 = sphi 0, %s258
      %s276 = sphi 0, %s276
      %s278 = sphi 0, %s276
      %s279 = sphi 0, %s278
      %s293 = sphi 0, %s279
      %s297 = sphi 0, %s297
      %s299 = sphi 0, %s297
      %s300 = sphi 0, %s299
      %s314 = sphi 0, %s300
      %s318 = sphi 0, %s318
      %s320 = sphi 0, %s318
      %s321 = sphi 0, %s320
      %s335 = sphi 0, %s321
      %s339 = sphi 0, %s339
      %s341 = sphi 0, %s339
      %s342 = sphi 0, %s341
      %s356 = sphi 0, %s342
      %s360 = sphi 0, %s360
      %s362 = sphi 0, %s360
      %s363 = sphi 0, %s362
      %s377 = sphi 0, %s363
      %s385 = sphi 0, %s387
      %s388 = sphi 0, %s385
      %s389 = sphi 0, %s388
      %s405 = sphi 0, %s389
      %s413 = sphi 0, %s415
      %s416 = sphi 0, %s413
      %s417 = sphi 0, %s416
      %s433 = sphi 0, %s417
    $region4: #{encoder_layer.3} parent=1 // loop_header_branch
      %32 = sbr.rel (%p30) target = $region8
    $region5: #{encoder_layer.3} parent=1 // loop_body
      %s34 = ssub.s32 %s29, 1
      %s35 = ssub.s32 %s29, 2
      %s42 = sadd.s32 1, %s37
      %p43 = scmp.ge.s32.totalorder %s42, 1
      %s44 = scalar_select %p43, 0, %s42
      %s45 = sadd.s32 1, %s36
      %s46 = scalar_select %p43, %s45, %s36
      %p47 = scmp.ge.s32.totalorder %s46, 2
      %s48 = scalar_select %p47, 0, %s46
      %s49 = ssub.s32 %s36, %s48
      %s50 = ssub.s32 %s37, %s44
      %s51 = sor.u32 %s49, %s50
      %p52 = scmp.eq.s32.totalorder %s51, 0
      %s54 = sadd.s32 %s53, 1
      %s55 = scalar_select %p52, %s53, %s54
      %p58 = pneg %p52
      %p59 = scmp.eq.s32.totalorder %s29, 1
      %p60 = por %p58, %p59
      %p61 = scmp.ne.s32.totalorder %s53, %s56
      %p62 = scmp.eq.s32.totalorder %s29, 0
      %p63 = por %p61, %p62
      %p64 = scmp.ne.s32.totalorder %s53, %s56
      %p65 = scmp.eq.s32.totalorder %s34, 1
      %p66 = por %p64, %p65
      %p67 = scmp.ne.s32.totalorder %s56, %s57
      %p68 = scmp.eq.s32.totalorder %s34, 0
      %p69 = por %p67, %p68
      %p70 = scmp.ne.s32.totalorder %s56, %s57
      %p71 = scmp.eq.s32.totalorder %s35, 1
      %p72 = por %p70, %p71
      %p74 = scmp.ne.s32.totalorder %s57, %s73
      %p75 = scmp.eq.s32.totalorder %s35, 0
      %p76 = por %p74, %p75
      %s77 = ssub.s32 %s36, %s48
      %p78 = scmp.eq.s32.totalorder %s77, 0
      %s80 = sadd.s32 %s79, 1
      %s81 = scalar_select %p78, %s79, %s80
      %p84 = pneg %p78
      %p85 = scmp.eq.s32.totalorder %s29, 1
      %p86 = por %p84, %p85
      %p87 = scmp.ne.s32.totalorder %s79, %s82
      %p88 = scmp.eq.s32.totalorder %s29, 0
      %p89 = por %p87, %p88
      %p90 = scmp.ne.s32.totalorder %s79, %s82
      %p91 = scmp.eq.s32.totalorder %s34, 1
      %p92 = por %p90, %p91
      %p93 = scmp.ne.s32.totalorder %s82, %s83
      %p94 = scmp.eq.s32.totalorder %s34, 0
      %p95 = por %p93, %p94
      %p96 = scmp.ne.s32.totalorder %s82, %s83
      %p97 = scmp.eq.s32.totalorder %s35, 1
      %p98 = por %p96, %p97
      %p100 = scmp.ne.s32.totalorder %s83, %s99
      %p101 = scmp.eq.s32.totalorder %s35, 0
      %p102 = por %p100, %p101
      %s103 = ssub.s32 %s36, %s48
      %p104 = scmp.eq.s32.totalorder %s103, 0
      %s106 = sadd.s32 %s105, 1
      %s107 = scalar_select %p104, %s105, %s106
      %p110 = pneg %p104
      %p111 = scmp.eq.s32.totalorder %s29, 1
      %p112 = por %p110, %p111
      %p113 = scmp.ne.s32.totalorder %s105, %s108
      %p114 = scmp.eq.s32.totalorder %s29, 0
      %p115 = por %p113, %p114
      %p116 = scmp.ne.s32.totalorder %s105, %s108
      %p117 = scmp.eq.s32.totalorder %s34, 1
      %p118 = por %p116, %p117
      %p119 = scmp.ne.s32.totalorder %s108, %s109
      %p120 = scmp.eq.s32.totalorder %s34, 0
      %p121 = por %p119, %p120
      %p122 = scmp.ne.s32.totalorder %s108, %s109
      %p123 = scmp.eq.s32.totalorder %s35, 1
      %p124 = por %p122, %p123
      %p126 = scmp.ne.s32.totalorder %s109, %s125
      %p127 = scmp.eq.s32.totalorder %s35, 0
      %p128 = por %p126, %p127
      %s130 = sadd.s32 %s129, 1
      %p133 = scmp.eq.s32.totalorder %s29, 1
      %p134 = scmp.ne.s32.totalorder %s129, %s131
      %p135 = scmp.eq.s32.totalorder %s29, 0
      %p136 = por %p134, %p135
      %p137 = scmp.ne.s32.totalorder %s129, %s131
      %p138 = scmp.eq.s32.totalorder %s34, 1
      %p139 = por %p137, %p138
      %p140 = scmp.ne.s32.totalorder %s131, %s132
      %p141 = scmp.eq.s32.totalorder %s34, 0
      %p142 = por %p140, %p141
      %p143 = scmp.ne.s32.totalorder %s131, %s132
      %p144 = scmp.eq.s32.totalorder %s35, 1
      %p145 = por %p143, %p144
      %p147 = scmp.ne.s32.totalorder %s132, %s146
      %p148 = scmp.eq.s32.totalorder %s35, 0
      %p149 = por %p147, %p148
      %s151 = sadd.s32 %s150, 1
      %p154 = scmp.eq.s32.totalorder %s29, 1
      %p155 = scmp.ne.s32.totalorder %s150, %s152
      %p156 = scmp.eq.s32.totalorder %s29, 0
      %p157 = por %p155, %p156
      %p158 = scmp.ne.s32.totalorder %s150, %s152
      %p159 = scmp.eq.s32.totalorder %s34, 1
      %p160 = por %p158, %p159
      %p161 = scmp.ne.s32.totalorder %s152, %s153
      %p162 = scmp.eq.s32.totalorder %s34, 0
      %p163 = por %p161, %p162
      %p164 = scmp.ne.s32.totalorder %s152, %s153
      %p165 = scmp.eq.s32.totalorder %s35, 1
      %p166 = por %p164, %p165
      %p168 = scmp.ne.s32.totalorder %s153, %s167
      %p169 = scmp.eq.s32.totalorder %s35, 0
      %p170 = por %p168, %p169
      %s172 = sadd.s32 %s171, 1
      %p175 = scmp.eq.s32.totalorder %s29, 1
      %p176 = scmp.ne.s32.totalorder %s171, %s173
      %p177 = scmp.eq.s32.totalorder %s29, 0
      %p178 = por %p176, %p177
      %p179 = scmp.ne.s32.totalorder %s171, %s173
      %p180 = scmp.eq.s32.totalorder %s34, 1
      %p181 = por %p179, %p180
      %p182 = scmp.ne.s32.totalorder %s173, %s174
      %p183 = scmp.eq.s32.totalorder %s34, 0
      %p184 = por %p182, %p183
      %p185 = scmp.ne.s32.totalorder %s173, %s174
      %p186 = scmp.eq.s32.totalorder %s35, 1
      %p187 = por %p185, %p186
      %p189 = scmp.ne.s32.totalorder %s174, %s188
      %p190 = scmp.eq.s32.totalorder %s35, 0
      %p191 = por %p189, %p190
      %s193 = sadd.s32 %s192, 1
      %p196 = scmp.eq.s32.totalorder %s29, 1
      %p197 = scmp.ne.s32.totalorder %s192, %s194
      %p198 = scmp.eq.s32.totalorder %s29, 0
      %p199 = por %p197, %p198
      %p200 = scmp.ne.s32.totalorder %s192, %s194
      %p201 = scmp.eq.s32.totalorder %s34, 1
      %p202 = por %p200, %p201
      %p203 = scmp.ne.s32.totalorder %s194, %s195
      %p204 = scmp.eq.s32.totalorder %s34, 0
      %p205 = por %p203, %p204
      %p206 = scmp.ne.s32.totalorder %s194, %s195
      %p207 = scmp.eq.s32.totalorder %s35, 1
      %p208 = por %p206, %p207
      %p210 = scmp.ne.s32.totalorder %s195, %s209
      %p211 = scmp.eq.s32.totalorder %s35, 0
      %p212 = por %p210, %p211
      %s214 = sadd.s32 %s213, 1
      %p217 = scmp.eq.s32.totalorder %s29, 1
      %p218 = scmp.ne.s32.totalorder %s213, %s215
      %p219 = scmp.eq.s32.totalorder %s29, 0
      %p220 = por %p218, %p219
      %p221 = scmp.ne.s32.totalorder %s213, %s215
      %p222 = scmp.eq.s32.totalorder %s34, 1
      %p223 = por %p221, %p222
      %p224 = scmp.ne.s32.totalorder %s215, %s216
      %p225 = scmp.eq.s32.totalorder %s34, 0
      %p226 = por %p224, %p225
      %p227 = scmp.ne.s32.totalorder %s215, %s216
      %p228 = scmp.eq.s32.totalorder %s35, 1
      %p229 = por %p227, %p228
      %p231 = scmp.ne.s32.totalorder %s216, %s230
      %p232 = scmp.eq.s32.totalorder %s35, 0
      %p233 = por %p231, %p232
      %s235 = sadd.s32 %s234, 1
      %p238 = scmp.eq.s32.totalorder %s29, 1
      %p239 = scmp.ne.s32.totalorder %s234, %s236
      %p240 = scmp.eq.s32.totalorder %s29, 0
      %p241 = por %p239, %p240
      %p242 = scmp.ne.s32.totalorder %s234, %s236
      %p243 = scmp.eq.s32.totalorder %s34, 1
      %p244 = por %p242, %p243
      %p245 = scmp.ne.s32.totalorder %s236, %s237
      %p246 = scmp.eq.s32.totalorder %s34, 0
      %p247 = por %p245, %p246
      %p248 = scmp.ne.s32.totalorder %s236, %s237
      %p249 = scmp.eq.s32.totalorder %s35, 1
      %p250 = por %p248, %p249
      %p252 = scmp.ne.s32.totalorder %s237, %s251
      %p253 = scmp.eq.s32.totalorder %s35, 0
      %p254 = por %p252, %p253
      %s256 = sadd.s32 %s255, 1
      %p259 = scmp.eq.s32.totalorder %s29, 1
      %p260 = scmp.ne.s32.totalorder %s255, %s257
      %p261 = scmp.eq.s32.totalorder %s29, 0
      %p262 = por %p260, %p261
      %p263 = scmp.ne.s32.totalorder %s255, %s257
      %p264 = scmp.eq.s32.totalorder %s34, 1
      %p265 = por %p263, %p264
      %p266 = scmp.ne.s32.totalorder %s257, %s258
      %p267 = scmp.eq.s32.totalorder %s34, 0
      %p268 = por %p266, %p267
      %p269 = scmp.ne.s32.totalorder %s257, %s258
      %p270 = scmp.eq.s32.totalorder %s35, 1
      %p271 = por %p269, %p270
      %p273 = scmp.ne.s32.totalorder %s258, %s272
      %p274 = scmp.eq.s32.totalorder %s35, 0
      %p275 = por %p273, %p274
      %s277 = sadd.s32 %s276, 1
      %p280 = scmp.eq.s32.totalorder %s29, 1
      %p281 = scmp.ne.s32.totalorder %s276, %s278
      %p282 = scmp.eq.s32.totalorder %s29, 0
      %p283 = por %p281, %p282
      %p284 = scmp.ne.s32.totalorder %s276, %s278
      %p285 = scmp.eq.s32.totalorder %s34, 1
      %p286 = por %p284, %p285
      %p287 = scmp.ne.s32.totalorder %s278, %s279
      %p288 = scmp.eq.s32.totalorder %s34, 0
      %p289 = por %p287, %p288
      %p290 = scmp.ne.s32.totalorder %s278, %s279
      %p291 = scmp.eq.s32.totalorder %s35, 1
      %p292 = por %p290, %p291
      %p294 = scmp.ne.s32.totalorder %s279, %s293
      %p295 = scmp.eq.s32.totalorder %s35, 0
      %p296 = por %p294, %p295
      %s298 = sadd.s32 %s297, 1
      %p301 = scmp.eq.s32.totalorder %s29, 1
      %p302 = scmp.ne.s32.totalorder %s297, %s299
      %p303 = scmp.eq.s32.totalorder %s29, 0
      %p304 = por %p302, %p303
      %p305 = scmp.ne.s32.totalorder %s297, %s299
      %p306 = scmp.eq.s32.totalorder %s34, 1
      %p307 = por %p305, %p306
      %p308 = scmp.ne.s32.totalorder %s299, %s300
      %p309 = scmp.eq.s32.totalorder %s34, 0
      %p310 = por %p308, %p309
      %p311 = scmp.ne.s32.totalorder %s299, %s300
      %p312 = scmp.eq.s32.totalorder %s35, 1
      %p313 = por %p311, %p312
      %p315 = scmp.ne.s32.totalorder %s300, %s314
      %p316 = scmp.eq.s32.totalorder %s35, 0
      %p317 = por %p315, %p316
      %s319 = sadd.s32 %s318, 1
      %p322 = scmp.eq.s32.totalorder %s29, 1
      %p323 = scmp.ne.s32.totalorder %s318, %s320
      %p324 = scmp.eq.s32.totalorder %s29, 0
      %p325 = por %p323, %p324
      %p326 = scmp.ne.s32.totalorder %s318, %s320
      %p327 = scmp.eq.s32.totalorder %s34, 1
      %p328 = por %p326, %p327
      %p329 = scmp.ne.s32.totalorder %s320, %s321
      %p330 = scmp.eq.s32.totalorder %s34, 0
      %p331 = por %p329, %p330
      %p332 = scmp.ne.s32.totalorder %s320, %s321
      %p333 = scmp.eq.s32.totalorder %s35, 1
      %p334 = por %p332, %p333
      %p336 = scmp.ne.s32.totalorder %s321, %s335
      %p337 = scmp.eq.s32.totalorder %s35, 0
      %p338 = por %p336, %p337
      %s340 = sadd.s32 %s339, 1
      %p343 = scmp.eq.s32.totalorder %s29, 1
      %p344 = scmp.ne.s32.totalorder %s339, %s341
      %p345 = scmp.eq.s32.totalorder %s29, 0
      %p346 = por %p344, %p345
      %p347 = scmp.ne.s32.totalorder %s339, %s341
      %p348 = scmp.eq.s32.totalorder %s34, 1
      %p349 = por %p347, %p348
      %p350 = scmp.ne.s32.totalorder %s341, %s342
      %p351 = scmp.eq.s32.totalorder %s34, 0
      %p352 = por %p350, %p351
      %p353 = scmp.ne.s32.totalorder %s341, %s342
      %p354 = scmp.eq.s32.totalorder %s35, 1
      %p355 = por %p353, %p354
      %p357 = scmp.ne.s32.totalorder %s342, %s356
      %p358 = scmp.eq.s32.totalorder %s35, 0
      %p359 = por %p357, %p358
      %s361 = sadd.s32 %s360, 1
      %p364 = scmp.eq.s32.totalorder %s29, 1
      %p365 = scmp.ne.s32.totalorder %s360, %s362
      %p366 = scmp.eq.s32.totalorder %s29, 0
      %p367 = por %p365, %p366
      %p368 = scmp.ne.s32.totalorder %s360, %s362
      %p369 = scmp.eq.s32.totalorder %s34, 1
      %p370 = por %p368, %p369
      %p371 = scmp.ne.s32.totalorder %s362, %s363
      %p372 = scmp.eq.s32.totalorder %s34, 0
      %p373 = por %p371, %p372
      %p374 = scmp.ne.s32.totalorder %s362, %s363
      %p375 = scmp.eq.s32.totalorder %s35, 1
      %p376 = por %p374, %p375
      %p378 = scmp.ne.s32.totalorder %s363, %s377
      %p379 = scmp.eq.s32.totalorder %s35, 0
      %p380 = por %p378, %p379
      %s381 = ssub.s32 %s36, %s48
      %s382 = ssub.s32 %s37, %s44
      %s383 = sor.u32 %s381, %s382
      %p384 = scmp.eq.s32.totalorder %s383, 0
      %s386 = sadd.s32 %s385, 1
      %s387 = scalar_select %p384, %s385, %s386
      %p390 = pneg %p384
      %p391 = scmp.eq.s32.totalorder %s29, 1
      %p392 = por %p390, %p391
      %p393 = scmp.ne.s32.totalorder %s385, %s388
      %p394 = scmp.eq.s32.totalorder %s29, 0
      %p395 = por %p393, %p394
      %p396 = scmp.ne.s32.totalorder %s385, %s388
      %p397 = scmp.eq.s32.totalorder %s34, 1
      %p398 = por %p396, %p397
      %p399 = scmp.ne.s32.totalorder %s388, %s389
      %p400 = scmp.eq.s32.totalorder %s34, 0
      %p401 = por %p399, %p400
      %p402 = scmp.ne.s32.totalorder %s388, %s389
      %p403 = scmp.eq.s32.totalorder %s35, 1
      %p404 = por %p402, %p403
      %p406 = scmp.ne.s32.totalorder %s389, %s405
      %p407 = scmp.eq.s32.totalorder %s35, 0
      %p408 = por %p406, %p407
      %s409 = ssub.s32 %s36, %s48
      %s410 = ssub.s32 %s37, %s44
      %s411 = sor.u32 %s409, %s410
      %p412 = scmp.eq.s32.totalorder %s411, 0
      %s414 = sadd.s32 %s413, 1
      %s415 = scalar_select %p412, %s413, %s414
      %p418 = pneg %p412
      %p419 = scmp.eq.s32.totalorder %s29, 1
      %p420 = por %p418, %p419
      %p421 = scmp.ne.s32.totalorder %s413, %s416
      %p422 = scmp.eq.s32.totalorder %s29, 0
      %p423 = por %p421, %p422
      %p424 = scmp.ne.s32.totalorder %s413, %s416
      %p425 = scmp.eq.s32.totalorder %s34, 1
      %p426 = por %p424, %p425
      %p427 = scmp.ne.s32.totalorder %s416, %s417
      %p428 = scmp.eq.s32.totalorder %s34, 0
      %p429 = por %p427, %p428
      %p430 = scmp.ne.s32.totalorder %s416, %s417
      %p431 = scmp.eq.s32.totalorder %s35, 1
      %p432 = por %p430, %p431
      %p434 = scmp.ne.s32.totalorder %s417, %s433
      %p435 = scmp.eq.s32.totalorder %s35, 0
      %p436 = por %p434, %p435
      %p437 = scmp.le.s32.totalorder 1, %s29
      %p438 = scmp.lt.s32.totalorder %s29, 3
      %p439 = pnand %p437, %p438
      %p440 = pneg %p439
      // Predicated region
      $region9: #{encoder_layer.3} parent=5 // pred_check
        _
      $region10: #{encoder_layer.3} parent=5 // pred_check_branch
        %442 = sbr.rel (%p439) target = $region12
      $region11: #{encoder_layer.3} parent=5 // pred_region
        %s443 = ssub.s32 %s29, 1
        // Predicated region
        $region13: #{encoder_layer.3} parent=11 // pred_check
          %p444 = pneg %p142
        $region14: #{encoder_layer.3} parent=11 // pred_check_branch
          %446 = sbr.rel (%p444) target = $region16
        $region15: #{encoder_layer.3} parent=11 // pred_region
          _
        $region16: #{encoder_layer.3} parent=11 // pred_fallthru
          _
        // Predicated region
        $region17: #{encoder_layer.3} parent=11 // pred_check
          %p447 = pneg %p163
        $region18: #{encoder_layer.3} parent=11 // pred_check_branch
          %449 = sbr.rel (%p447) target = $region20
        $region19: #{encoder_layer.3} parent=11 // pred_region
          _
        $region20: #{encoder_layer.3} parent=11 // pred_fallthru
          _
        // Predicated region
        $region21: #{encoder_layer.3} parent=11 // pred_check
          %p450 = pneg %p184
        $region22: #{encoder_layer.3} parent=11 // pred_check_branch
          %452 = sbr.rel (%p450) target = $region24
        $region23: #{encoder_layer.3} parent=11 // pred_region
          _
        $region24: #{encoder_layer.3} parent=11 // pred_fallthru
          _
        // Predicated region
        $region25: #{encoder_layer.3} parent=11 // pred_check
          %p453 = pneg %p205
        $region26: #{encoder_layer.3} parent=11 // pred_check_branch
          %455 = sbr.rel (%p453) target = $region28
        $region27: #{encoder_layer.3} parent=11 // pred_region
          _
        $region28: #{encoder_layer.3} parent=11 // pred_fallthru
          _
        // Predicated region
        $region29: #{encoder_layer.3} parent=11 // pred_check
          %p456 = pneg %p226
        $region30: #{encoder_layer.3} parent=11 // pred_check_branch
          %458 = sbr.rel (%p456) target = $region32
        $region31: #{encoder_layer.3} parent=11 // pred_region
          _
        $region32: #{encoder_layer.3} parent=11 // pred_fallthru
          _
        // Predicated region
        $region33: #{encoder_layer.3} parent=11 // pred_check
          %p459 = pneg %p247
        $region34: #{encoder_layer.3} parent=11 // pred_check_branch
          %461 = sbr.rel (%p459) target = $region36
        $region35: #{encoder_layer.3} parent=11 // pred_region
          _
        $region36: #{encoder_layer.3} parent=11 // pred_fallthru
          _
        // Predicated region
        $region37: #{encoder_layer.3} parent=11 // pred_check
          %p462 = pneg %p268
        $region38: #{encoder_layer.3} parent=11 // pred_check_branch
          %464 = sbr.rel (%p462) target = $region40
        $region39: #{encoder_layer.3} parent=11 // pred_region
          _
        $region40: #{encoder_layer.3} parent=11 // pred_fallthru
          _
        // Predicated region
        $region41: #{encoder_layer.3} parent=11 // pred_check
          %p465 = pneg %p289
        $region42: #{encoder_layer.3} parent=11 // pred_check_branch
          %467 = sbr.rel (%p465) target = $region44
        $region43: #{encoder_layer.3} parent=11 // pred_region
          _
        $region44: #{encoder_layer.3} parent=11 // pred_fallthru
          _
        // Predicated region
        $region45: #{encoder_layer.3} parent=11 // pred_check
          %p468 = pneg %p310
        $region46: #{encoder_layer.3} parent=11 // pred_check_branch
          %470 = sbr.rel (%p468) target = $region48
        $region47: #{encoder_layer.3} parent=11 // pred_region
          _
        $region48: #{encoder_layer.3} parent=11 // pred_fallthru
          _
        // Predicated region
        $region49: #{encoder_layer.3} parent=11 // pred_check
          %p471 = pneg %p331
        $region50: #{encoder_layer.3} parent=11 // pred_check_branch
          %473 = sbr.rel (%p471) target = $region52
        $region51: #{encoder_layer.3} parent=11 // pred_region
          _
        $region52: #{encoder_layer.3} parent=11 // pred_fallthru
          _
        // Predicated region
        $region53: #{encoder_layer.3} parent=11 // pred_check
          %p474 = pneg %p352
        $region54: #{encoder_layer.3} parent=11 // pred_check_branch
          %476 = sbr.rel (%p474) target = $region56
        $region55: #{encoder_layer.3} parent=11 // pred_region
          _
        $region56: #{encoder_layer.3} parent=11 // pred_fallthru
          _
        // Predicated region
        $region57: #{encoder_layer.3} parent=11 // pred_check
          %p477 = pneg %p373
        $region58: #{encoder_layer.3} parent=11 // pred_check_branch
          %479 = sbr.rel (%p477) target = $region60
        $region59: #{encoder_layer.3} parent=11 // pred_region
          _
        $region60: #{encoder_layer.3} parent=11 // pred_fallthru
          _
      $region12: #{encoder_layer.3} parent=5 // pred_fallthru
        _
      %p480 = scmp.lt.s32.totalorder %s29, 2
      // Predicated region
      $region61: #{encoder_layer.3} parent=5 // pred_check
        %p481 = pneg %p480
      $region62: #{encoder_layer.3} parent=5 // pred_check_branch
        %483 = sbr.rel (%p481) target = $region64
      $region63: #{encoder_layer.3} parent=5 // pred_region
        // Predicated region
        $region65: #{encoder_layer.3} parent=63 // pred_check
          %p484 = pneg %p63
        $region66: #{encoder_layer.3} parent=63 // pred_check_branch
          %486 = sbr.rel (%p484) target = $region68
        $region67: #{encoder_layer.3} parent=63 // pred_region
          %p487 = scmp.lt.s32.totalorder %s36, 1
          %s488 = scalar_select %p487, %s36, 1
          %p489 = scmp.lt.s32.totalorder %s37, 0
          %s490 = scalar_select %p489, %s37, 0
          %s491 = sadd.s32 %s490, %s488
          %s492 = smul.addr %s491, 8
          %s493 = scalar_lea.vmem %s0, %s492
        $region68: #{encoder_layer.3} parent=63 // pred_fallthru
          _
        // Predicated region
        $region69: #{encoder_layer.3} parent=63 // pred_check
          %p494 = pneg %p89
        $region70: #{encoder_layer.3} parent=63 // pred_check_branch
          %496 = sbr.rel (%p494) target = $region72
        $region71: #{encoder_layer.3} parent=63 // pred_region
          %p497 = scmp.lt.s32.totalorder %s36, 1
          %s498 = scalar_select %p497, %s36, 1
          %s499 = smul.addr %s498, 4
          %s500 = scalar_lea.vmem %s1, %s499
        $region72: #{encoder_layer.3} parent=63 // pred_fallthru
          _
        // Predicated region
        $region73: #{encoder_layer.3} parent=63 // pred_check
          %p501 = pneg %p115
        $region74: #{encoder_layer.3} parent=63 // pred_check_branch
          %503 = sbr.rel (%p501) target = $region76
        $region75: #{encoder_layer.3} parent=63 // pred_region
          %p504 = scmp.lt.s32.totalorder %s36, 1
          %s505 = scalar_select %p504, %s36, 1
          %s506 = smul.addr %s505, 4
          %s507 = scalar_lea.vmem %s2, %s506
        $region76: #{encoder_layer.3} parent=63 // pred_fallthru
          _
      $region64: #{encoder_layer.3} parent=5 // pred_fallthru
        _
      %p508 = scmp.le.s32.totalorder 1, %s29
      %p509 = scmp.lt.s32.totalorder %s29, 3
      %p510 = pnand %p508, %p509
      %p511 = pneg %p510
      // Predicated region
      $region77: #{encoder_layer.3} parent=5 // pred_check
        _
      $region78: #{encoder_layer.3} parent=5 // pred_check_branch
        %513 = sbr.rel (%p510) target = $region80
      $region79: #{encoder_layer.3} parent=5 // pred_region
        %s514 = ssub.s32 %s29, 1
        %p515 = scmp.lt.s32.totalorder %s38, 1
        %s516 = scalar_select %p515, %s38, 1
        %p517 = scmp.lt.s32.totalorder %s39, 0
        %s518 = scalar_select %p517, %s39, 0
        %s519 = sadd.s32 %s518, %s516
        %s520 = smul.addr %s519, 8
        %s521 = scalar_lea.vmem %s0, %s520
        %p522 = pneg %p69
        %p523 = pneg %p66
        %p524 = scmp.lt.s32.totalorder %s38, 1
        %s525 = scalar_select %p524, %s38, 1
        %s526 = smul.addr %s525, 4
        %s527 = scalar_lea.vmem %s1, %s526
        %p528 = pneg %p95
        %p529 = pneg %p92
        %p530 = scmp.lt.s32.totalorder %s38, 1
        %s531 = scalar_select %p530, %s38, 1
        %s532 = smul.addr %s531, 4
        %s533 = scalar_lea.vmem %s2, %s532
        %p534 = pneg %p121
        %p535 = pneg %p118
        %p536 = pneg %p142
        %p537 = pneg %p139
        %p538 = pneg %p163
        %p539 = pneg %p160
        %p540 = pneg %p184
        %p541 = pneg %p181
        %p542 = pneg %p205
        %p543 = pneg %p202
        %p544 = pneg %p226
        %p545 = pneg %p223
        %p546 = pneg %p247
        %p547 = pneg %p244
        %p548 = pneg %p268
        %p549 = pneg %p265
        %p550 = pneg %p289
        %p551 = pneg %p286
        %p552 = pneg %p310
        %p553 = pneg %p307
        %p554 = pneg %p331
        %p555 = pneg %p328
        %p556 = pneg %p352
        %p557 = pneg %p349
        %p558 = pneg %p373
        %p559 = pneg %p370
        %p560 = pneg %p401
        %p561 = pneg %p398
        %s562 = sand.u32 %s388, 1
        %s563 = scalar_lea.sflag [#allocation3], %s562
        %s564 = sand.u32 %s388, 1
        %s565 = smul.addr %s564, 8
        %s566 = scalar_lea.vmem [#allocation2], %s565
        %p567 = pneg %p429
        %p568 = pneg %p426
        %s569 = sand.u32 %s416, 1
        %s570 = scalar_lea.sflag [#allocation5], %s569
        %s571 = sand.u32 %s416, 1
        %s572 = smul.addr %s571, 32
        %s573 = scalar_lea.vmem [#allocation4], %s572
        %p574 = scmp.lt.s32.totalorder %s38, 1
        %s575 = scalar_select %p574, %s38, 1
        %p576 = scmp.lt.s32.totalorder %s39, 0
        %s577 = scalar_select %p576, %s39, 0
        %s578 = sadd.s32 %s577, %s575
        %s579 = smul.addr %s578, 8
        %s580 = scalar_lea.vmem %s0, %s579
        %p581 = scmp.lt.s32.totalorder %s38, 1
        %s582 = scalar_select %p581, %s38, 1
        %s583 = smul.addr %s582, 4
        %s584 = scalar_lea.vmem %s1, %s583
        %p585 = scmp.lt.s32.totalorder %s38, 1
        %s586 = scalar_select %p585, %s38, 1
        %s587 = smul.addr %s586, 4
        %s588 = scalar_lea.vmem %s2, %s587
        %v590 = vld [vmem:[%s580] sm:$0xff]
        %v591 = vpack.c.bf16 %v590, %v590
        %v592 = vld [vmem:[%s584] sm:$0xf]
        %v593 = vld [vmem:[%s588] sm:$0xf]
        %v594 = vld [vmem:[%s3] sm:$0xf]
        %v595 = vld [vmem:[%s3 + $0x4] sm:$0xf]
        %v596 = vld [vmem:[%s3 + $0x8] sm:$0xf]
        %v597 = vld [vmem:[%s3 + $0xc] sm:$0xf]
        %v598 = vld [vmem:[%s4] sm:$0x1]
        %v600 = vlaneseq
        %v601 = vshrl.u32 %v600, 7
        %v602 = vsub.s32 0, %v601
        %v603 = vrot.slane %v598, %v602
        %v609 = vunpack.c.l.b16 %v594
        %v610 = vunpack.c.l.b16 %v595
        %v611 = vunpack.c.l.b16 %v596
        %v612 = vunpack.c.l.b16 %v597
        %v613 = vpack.c.b16 %v610, %v609
        %v614 = vpack.c.b16 %v612, %v611
        %vm617 = vcmask 261120
        %v619 = vsel %vm617, %v591, 0
        %621 = vmatprep.subr.bf16.mxu0 0
        %622 = vmatpush1.bf16.msra.mxu0 %v613
        %623 = vmatprep.subr.bf16.mxu0 0
        %624 = vmatpush1.bf16.msra.mxu0 %v614
        %625 = vmatprep.subr.bf16.mxu0 0
        %626 = vmatpush1.bf16.msra.mxu0 0
        %627 = vmatprep.subr.bf16.mxu0 0
        %628 = vmatpush1.bf16.msra.mxu0 0
        %629 = vmatprep.subr.bf16.mxu0 0
        %630 = vmatpush1.bf16.msra.mxu0 0
        %631 = vmatprep.subr.bf16.mxu0 0
        %632 = vmatpush1.bf16.msra.mxu0 0
        %633 = vmatprep.subr.bf16.mxu0 0
        %634 = vmatpush1.bf16.msra.mxu0 0
        %635 = vmatprep.subr.bf16.mxu0 0
        %636 = vmatpush1.bf16.msra.mxu0 0
        %637 = vmatprep.subr.bf16.mxu0 0
        %638 = vmatpush1.bf16.msra.mxu0 0
        %639 = vmatprep.subr.bf16.mxu0 0
        %640 = vmatpush1.bf16.msra.mxu0 0
        %641 = vmatprep.subr.bf16.mxu0 0
        %642 = vmatpush1.bf16.msra.mxu0 0
        %643 = vmatprep.subr.bf16.mxu0 0
        %644 = vmatpush1.bf16.msra.mxu0 0
        %645 = vmatprep.subr.bf16.mxu0 0
        %646 = vmatpush1.bf16.msra.mxu0 0
        %647 = vmatprep.subr.bf16.mxu0 0
        %648 = vmatpush1.bf16.msra.mxu0 0
        %649 = vmatprep.subr.bf16.mxu0 0
        %650 = vmatpush1.bf16.msra.mxu0 0
        %651 = vmatprep.subr.bf16.mxu0 0
        %652 = vmatpush1.bf16.msra.mxu0 0
        %653 = vmatprep.mubr.bf16.mxu0 0
        %654 = vmatmul.mubr.bf16.gmra.mrb[0].mxu0 %v619
        %v655 = vpop.f32.mrb[0].mxu0
        %v656 = vadd.f32 %v603, %v655
        %v657 = vpop.f32.mrb[0].mxu0
        %v658 = vpop.f32.mrb[0].mxu0
        %v659 = vpop.f32.mrb[0].mxu0
        %660 = vdwg.mxu0
        %v661 = vpack.c.bf16 %v656, %v656
        %vm662 = vcmask 64512
        %v664 = vsel %vm662, %v661, 0
        %v667 = vsel %vm662, %v592, 0
        %669 = vmatprep.subr.bf16.mxu0 0
        %670 = vmatpush1.bf16.xpose.msra.mxu0 %v667
        %671 = vmatprep.subr.bf16.mxu0 0
        %672 = vmatpush1.bf16.xpose.msra.mxu0 0
        %673 = vmatprep.subr.bf16.mxu0 0
        %674 = vmatpush1.bf16.xpose.msra.mxu0 0
        %675 = vmatprep.subr.bf16.mxu0 0
        %676 = vmatpush1.bf16.xpose.msra.mxu0 0
        %677 = vmatprep.subr.bf16.mxu0 0
        %678 = vmatpush1.bf16.xpose.msra.mxu0 0
        %679 = vmatprep.subr.bf16.mxu0 0
        %680 = vmatpush1.bf16.xpose.msra.mxu0 0
        %681 = vmatprep.subr.bf16.mxu0 0
        %682 = vmatpush1.bf16.xpose.msra.mxu0 0
        %683 = vmatprep.subr.bf16.mxu0 0
        %684 = vmatpush1.bf16.xpose.msra.mxu0 0
        %685 = vmatprep.subr.bf16.mxu0 0
        %686 = vmatpush1.bf16.xpose.msra.mxu0 0
        %687 = vmatprep.subr.bf16.mxu0 0
        %688 = vmatpush1.bf16.xpose.msra.mxu0 0
        %689 = vmatprep.subr.bf16.mxu0 0
        %690 = vmatpush1.bf16.xpose.msra.mxu0 0
        %691 = vmatprep.subr.bf16.mxu0 0
        %692 = vmatpush1.bf16.xpose.msra.mxu0 0
        %693 = vmatprep.subr.bf16.mxu0 0
        %694 = vmatpush1.bf16.xpose.msra.mxu0 0
        %695 = vmatprep.subr.bf16.mxu0 0
        %696 = vmatpush1.bf16.xpose.msra.mxu0 0
        %697 = vmatprep.subr.bf16.mxu0 0
        %698 = vmatpush1.bf16.xpose.msra.mxu0 0
        %699 = vmatprep.subr.bf16.mxu0 0
        %700 = vmatpush1.bf16.xpose.msra.mxu0 0
        %701 = vmatprep.mubr.bf16.mxu0 0
        %702 = vmatmul.mubr.bf16.gmra.mrb[0].mxu0 %v664
        %v703 = vpop.f32.mrb[0].mxu0
        %v704 = vadd.f32 0.0, %v703
        %v705 = vpop.f32.mrb[0].mxu0
        %v706 = vpop.f32.mrb[0].mxu0
        %v707 = vpop.f32.mrb[0].mxu0
        %708 = vdwg.mxu0
        %v709 = vsel %vm662, %v704, -inf
        %710 = vmax.xlane.f32.xlu0 %v709
        %v711 = vpop.xlane.xlu0 %710
        %v712 = vsub.f32 %v704, %v711
        %v713 = vmul.f32 %v712, 1.442695
        %v714 = vpow.pop %v713
        %v715 = vsel %vm662, %v714, 0.0
        %716 = vadd.xlane.f32.xlu0 %v715
        %v717 = vpop.xlane.xlu0 %716
        %v718 = vrcp.pop %v717
        %v719 = vmul.f32 %v714, %v718
        %720 = vst.msk [vmem:[%s573] sm:$0xff] %vm662, %v719
        %v721 = vpack.c.bf16 %v719, %v719
        %v723 = vsel %vm662, %v721, 0
        %vm725 = vcmask 1043456
        %v727 = vsel %vm725, %v593, 0
        %729 = vmatprep.subr.bf16.mxu0 0
        %730 = vmatpush1.bf16.msra.mxu0 %v727
        %731 = vmatprep.subr.bf16.mxu0 0
        %732 = vmatpush1.bf16.msra.mxu0 0
        %733 = vmatprep.subr.bf16.mxu0 0
        %734 = vmatpush1.bf16.msra.mxu0 0
        %735 = vmatprep.subr.bf16.mxu0 0
        %736 = vmatpush1.bf16.msra.mxu0 0
        %737 = vmatprep.subr.bf16.mxu0 0
        %738 = vmatpush1.bf16.msra.mxu0 0
        %739 = vmatprep.subr.bf16.mxu0 0
        %740 = vmatpush1.bf16.msra.mxu0 0
        %741 = vmatprep.subr.bf16.mxu0 0
        %742 = vmatpush1.bf16.msra.mxu0 0
        %743 = vmatprep.subr.bf16.mxu0 0
        %744 = vmatpush1.bf16.msra.mxu0 0
        %745 = vmatprep.subr.bf16.mxu0 0
        %746 = vmatpush1.bf16.msra.mxu0 0
        %747 = vmatprep.subr.bf16.mxu0 0
        %748 = vmatpush1.bf16.msra.mxu0 0
        %749 = vmatprep.subr.bf16.mxu0 0
        %750 = vmatpush1.bf16.msra.mxu0 0
        %751 = vmatprep.subr.bf16.mxu0 0
        %752 = vmatpush1.bf16.msra.mxu0 0
        %753 = vmatprep.subr.bf16.mxu0 0
        %754 = vmatpush1.bf16.msra.mxu0 0
        %755 = vmatprep.subr.bf16.mxu0 0
        %756 = vmatpush1.bf16.msra.mxu0 0
        %757 = vmatprep.subr.bf16.mxu0 0
        %758 = vmatpush1.bf16.msra.mxu0 0
        %759 = vmatprep.subr.bf16.mxu0 0
        %760 = vmatpush1.bf16.msra.mxu0 0
        %761 = vmatprep.mubr.bf16.mxu0 0
        %762 = vmatmul.mubr.bf16.gmra.mrb[0].mxu0 %v723
        %v763 = vpop.f32.mrb[0].mxu0
        %v764 = vadd.f32 0.0, %v763
        %v765 = vpop.f32.mrb[0].mxu0
        %v766 = vpop.f32.mrb[0].mxu0
        %v767 = vpop.f32.mrb[0].mxu0
        %768 = vdwg.mxu0
        %770 = vrot.lane.b32.xlu0 %v661, 120
        %v771 = vpop.permute.xlu0 %770
        %v773 = vunpack.c.l.b16 %v592
        %v774 = vpack.c.b16 %v773, %v773
        %775 = vrot.lane.b32.xlu0 %v774, 120
        %v776 = vpop.permute.xlu0 %775
        %v778 = vsel %vm662, %v771, 0
        %v781 = vsel %vm662, %v776, 0
        %783 = vmatprep.subr.bf16.mxu0 0
        %784 = vmatpush1.bf16.xpose.msra.mxu0 %v781
        %785 = vmatprep.subr.bf16.mxu0 0
        %786 = vmatpush1.bf16.xpose.msra.mxu0 0
        %787 = vmatprep.subr.bf16.mxu0 0
        %788 = vmatpush1.bf16.xpose.msra.mxu0 0
        %789 = vmatprep.subr.bf16.mxu0 0
        %790 = vmatpush1.bf16.xpose.msra.mxu0 0
        %791 = vmatprep.subr.bf16.mxu0 0
        %792 = vmatpush1.bf16.xpose.msra.mxu0 0
        %793 = vmatprep.subr.bf16.mxu0 0
        %794 = vmatpush1.bf16.xpose.msra.mxu0 0
        %795 = vmatprep.subr.bf16.mxu0 0
        %796 = vmatpush1.bf16.xpose.msra.mxu0 0
        %797 = vmatprep.subr.bf16.mxu0 0
        %798 = vmatpush1.bf16.xpose.msra.mxu0 0
        %799 = vmatprep.subr.bf16.mxu0 0
        %800 = vmatpush1.bf16.xpose.msra.mxu0 0
        %801 = vmatprep.subr.bf16.mxu0 0
        %802 = vmatpush1.bf16.xpose.msra.mxu0 0
        %803 = vmatprep.subr.bf16.mxu0 0
        %804 = vmatpush1.bf16.xpose.msra.mxu0 0
        %805 = vmatprep.subr.bf16.mxu0 0
        %806 = vmatpush1.bf16.xpose.msra.mxu0 0
        %807 = vmatprep.subr.bf16.mxu0 0
        %808 = vmatpush1.bf16.xpose.msra.mxu0 0
        %809 = vmatprep.subr.bf16.mxu0 0
        %810 = vmatpush1.bf16.xpose.msra.mxu0 0
        %811 = vmatprep.subr.bf16.mxu0 0
        %812 = vmatpush1.bf16.xpose.msra.mxu0 0
        %813 = vmatprep.subr.bf16.mxu0 0
        %814 = vmatpush1.bf16.xpose.msra.mxu0 0
        %815 = vmatprep.mubr.bf16.mxu0 0
        %816 = vmatmul.mubr.bf16.gmra.mrb[0].mxu0 %v778
        %v817 = vpop.f32.mrb[0].mxu0
        %v818 = vadd.f32 0.0, %v817
        %v819 = vpop.f32.mrb[0].mxu0
        %v820 = vpop.f32.mrb[0].mxu0
        %v821 = vpop.f32.mrb[0].mxu0
        %822 = vdwg.mxu0
        %v823 = vsel %vm662, %v818, -inf
        %824 = vmax.xlane.f32.xlu0 %v823
        %v825 = vpop.xlane.xlu0 %824
        %v826 = vsub.f32 %v818, %v825
        %v827 = vmul.f32 %v826, 1.442695
        %v828 = vpow.pop %v827
        %v829 = vsel %vm662, %v828, 0.0
        %830 = vadd.xlane.f32.xlu0 %v829
        %v831 = vpop.xlane.xlu0 %830
        %v832 = vrcp.pop %v831
        %v833 = vmul.f32 %v828, %v832
        %s834 = scalar_lea.vmem %s573, 8 [#allocation4]
        %835 = vst.msk [vmem:[%s834] sm:$0xff] %vm662, %v833
        %v836 = vpack.c.bf16 %v833, %v833
        %v838 = vunpack.c.l.b16 %v593
        %v839 = vpack.c.b16 %v838, %v838
        %840 = vrot.lane.b32.xlu0 %v839, 120
        %v841 = vpop.permute.xlu0 %840
        %v843 = vsel %vm662, %v836, 0
        %v846 = vsel %vm725, %v841, 0
        %848 = vmatprep.subr.bf16.mxu0 0
        %849 = vmatpush1.bf16.msra.mxu0 %v846
        %850 = vmatprep.subr.bf16.mxu0 0
        %851 = vmatpush1.bf16.msra.mxu0 0
        %852 = vmatprep.subr.bf16.mxu0 0
        %853 = vmatpush1.bf16.msra.mxu0 0
        %854 = vmatprep.subr.bf16.mxu0 0
        %855 = vmatpush1.bf16.msra.mxu0 0
        %856 = vmatprep.subr.bf16.mxu0 0
        %857 = vmatpush1.bf16.msra.mxu0 0
        %858 = vmatprep.subr.bf16.mxu0 0
        %859 = vmatpush1.bf16.msra.mxu0 0
        %860 = vmatprep.subr.bf16.mxu0 0
        %861 = vmatpush1.bf16.msra.mxu0 0
        %862 = vmatprep.subr.bf16.mxu0 0
        %863 = vmatpush1.bf16.msra.mxu0 0
        %864 = vmatprep.subr.bf16.mxu0 0
        %865 = vmatpush1.bf16.msra.mxu0 0
        %866 = vmatprep.subr.bf16.mxu0 0
        %867 = vmatpush1.bf16.msra.mxu0 0
        %868 = vmatprep.subr.bf16.mxu0 0
        %869 = vmatpush1.bf16.msra.mxu0 0
        %870 = vmatprep.subr.bf16.mxu0 0
        %871 = vmatpush1.bf16.msra.mxu0 0
        %872 = vmatprep.subr.bf16.mxu0 0
        %873 = vmatpush1.bf16.msra.mxu0 0
        %874 = vmatprep.subr.bf16.mxu0 0
        %875 = vmatpush1.bf16.msra.mxu0 0
        %876 = vmatprep.subr.bf16.mxu0 0
        %877 = vmatpush1.bf16.msra.mxu0 0
        %878 = vmatprep.subr.bf16.mxu0 0
        %879 = vmatpush1.bf16.msra.mxu0 0
        %880 = vmatprep.mubr.bf16.mxu0 0
        %881 = vmatmul.mubr.bf16.gmra.mrb[0].mxu0 %v843
        %v882 = vpop.f32.mrb[0].mxu0
        %v883 = vadd.f32 0.0, %v882
        %v884 = vpop.f32.mrb[0].mxu0
        %v885 = vpop.f32.mrb[0].mxu0
        %v886 = vpop.f32.mrb[0].mxu0
        %887 = vdwg.mxu0
        %888 = vrot.lane.b32.xlu0 %v661, 112
        %v889 = vpop.permute.xlu0 %888
        %890 = vrot.lane.b32.xlu0 %v774, 112
        %v891 = vpop.permute.xlu0 %890
        %v893 = vsel %vm662, %v889, 0
        %v896 = vsel %vm662, %v891, 0
        %898 = vmatprep.subr.bf16.mxu0 0
        %899 = vmatpush1.bf16.xpose.msra.mxu0 %v896
        %900 = vmatprep.subr.bf16.mxu0 0
        %901 = vmatpush1.bf16.xpose.msra.mxu0 0
        %902 = vmatprep.subr.bf16.mxu0 0
        %903 = vmatpush1.bf16.xpose.msra.mxu0 0
        %904 = vmatprep.subr.bf16.mxu0 0
        %905 = vmatpush1.bf16.xpose.msra.mxu0 0
        %906 = vmatprep.subr.bf16.mxu0 0
        %907 = vmatpush1.bf16.xpose.msra.mxu0 0
        %908 = vmatprep.subr.bf16.mxu0 0
        %909 = vmatpush1.bf16.xpose.msra.mxu0 0
        %910 = vmatprep.subr.bf16.mxu0 0
        %911 = vmatpush1.bf16.xpose.msra.mxu0 0
        %912 = vmatprep.subr.bf16.mxu0 0
        %913 = vmatpush1.bf16.xpose.msra.mxu0 0
        %914 = vmatprep.subr.bf16.mxu0 0
        %915 = vmatpush1.bf16.xpose.msra.mxu0 0
        %916 = vmatprep.subr.bf16.mxu0 0
        %917 = vmatpush1.bf16.xpose.msra.mxu0 0
        %918 = vmatprep.subr.bf16.mxu0 0
        %919 = vmatpush1.bf16.xpose.msra.mxu0 0
        %920 = vmatprep.subr.bf16.mxu0 0
        %921 = vmatpush1.bf16.xpose.msra.mxu0 0
        %922 = vmatprep.subr.bf16.mxu0 0
        %923 = vmatpush1.bf16.xpose.msra.mxu0 0
        %924 = vmatprep.subr.bf16.mxu0 0
        %925 = vmatpush1.bf16.xpose.msra.mxu0 0
        %926 = vmatprep.subr.bf16.mxu0 0
        %927 = vmatpush1.bf16.xpose.msra.mxu0 0
        %928 = vmatprep.subr.bf16.mxu0 0
        %929 = vmatpush1.bf16.xpose.msra.mxu0 0
        %930 = vmatprep.mubr.bf16.mxu0 0
        %931 = vmatmul.mubr.bf16.gmra.mrb[0].mxu0 %v893
        %v932 = vpop.f32.mrb[0].mxu0
        %v933 = vadd.f32 0.0, %v932
        %v934 = vpop.f32.mrb[0].mxu0
        %v935 = vpop.f32.mrb[0].mxu0
        %v936 = vpop.f32.mrb[0].mxu0
        %937 = vdwg.mxu0
        %v938 = vsel %vm662, %v933, -inf
        %939 = vmax.xlane.f32.xlu0 %v938
        %v940 = vpop.xlane.xlu0 %939
        %v941 = vsub.f32 %v933, %v940
        %v942 = vmul.f32 %v941, 1.442695
        %v943 = vpow.pop %v942
        %v944 = vsel %vm662, %v943, 0.0
        %945 = vadd.xlane.f32.xlu0 %v944
        %v946 = vpop.xlane.xlu0 %945
        %v947 = vrcp.pop %v946
        %v948 = vmul.f32 %v943, %v947
        %s949 = scalar_lea.vmem %s573, 16 [#allocation4]
        %950 = vst.msk [vmem:[%s949] sm:$0xff] %vm662, %v948
        %v951 = vpack.c.bf16 %v948, %v948
        %952 = vrot.lane.b32.xlu0 %v839, 112
        %v953 = vpop.permute.xlu0 %952
        %v955 = vsel %vm662, %v951, 0
        %v958 = vsel %vm725, %v953, 0
        %960 = vmatprep.subr.bf16.mxu0 0
        %961 = vmatpush1.bf16.msra.mxu0 %v958
        %962 = vmatprep.subr.bf16.mxu0 0
        %963 = vmatpush1.bf16.msra.mxu0 0
        %964 = vmatprep.subr.bf16.mxu0 0
        %965 = vmatpush1.bf16.msra.mxu0 0
        %966 = vmatprep.subr.bf16.mxu0 0
        %967 = vmatpush1.bf16.msra.mxu0 0
        %968 = vmatprep.subr.bf16.mxu0 0
        %969 = vmatpush1.bf16.msra.mxu0 0
        %970 = vmatprep.subr.bf16.mxu0 0
        %971 = vmatpush1.bf16.msra.mxu0 0
        %972 = vmatprep.subr.bf16.mxu0 0
        %973 = vmatpush1.bf16.msra.mxu0 0
        %974 = vmatprep.subr.bf16.mxu0 0
        %975 = vmatpush1.bf16.msra.mxu0 0
        %976 = vmatprep.subr.bf16.mxu0 0
        %977 = vmatpush1.bf16.msra.mxu0 0
        %978 = vmatprep.subr.bf16.mxu0 0
        %979 = vmatpush1.bf16.msra.mxu0 0
        %980 = vmatprep.subr.bf16.mxu0 0
        %981 = vmatpush1.bf16.msra.mxu0 0
        %982 = vmatprep.subr.bf16.mxu0 0
        %983 = vmatpush1.bf16.msra.mxu0 0
        %984 = vmatprep.subr.bf16.mxu0 0
        %985 = vmatpush1.bf16.msra.mxu0 0
        %986 = vmatprep.subr.bf16.mxu0 0
        %987 = vmatpush1.bf16.msra.mxu0 0
        %988 = vmatprep.subr.bf16.mxu0 0
        %989 = vmatpush1.bf16.msra.mxu0 0
        %990 = vmatprep.subr.bf16.mxu0 0
        %991 = vmatpush1.bf16.msra.mxu0 0
        %992 = vmatprep.mubr.bf16.mxu0 0
        %993 = vmatmul.mubr.bf16.gmra.mrb[0].mxu0 %v955
        %v994 = vpop.f32.mrb[0].mxu0
        %v995 = vadd.f32 0.0, %v994
        %v996 = vpop.f32.mrb[0].mxu0
        %v997 = vpop.f32.mrb[0].mxu0
        %v998 = vpop.f32.mrb[0].mxu0
        %999 = vdwg.mxu0
        %1000 = vrot.lane.b32.xlu0 %v661, 104
        %v1001 = vpop.permute.xlu0 %1000
        %1002 = vrot.lane.b32.xlu0 %v774, 104
        %v1003 = vpop.permute.xlu0 %1002
        %v1005 = vsel %vm662, %v1001, 0
        %v1008 = vsel %vm662, %v1003, 0
        %1010 = vmatprep.subr.bf16.mxu0 0
        %1011 = vmatpush1.bf16.xpose.msra.mxu0 %v1008
        %1012 = vmatprep.subr.bf16.mxu0 0
        %1013 = vmatpush1.bf16.xpose.msra.mxu0 0
        %1014 = vmatprep.subr.bf16.mxu0 0
        %1015 = vmatpush1.bf16.xpose.msra.mxu0 0
        %1016 = vmatprep.subr.bf16.mxu0 0
        %1017 = vmatpush1.bf16.xpose.msra.mxu0 0
        %1018 = vmatprep.subr.bf16.mxu0 0
        %1019 = vmatpush1.bf16.xpose.msra.mxu0 0
        %1020 = vmatprep.subr.bf16.mxu0 0
        %1021 = vmatpush1.bf16.xpose.msra.mxu0 0
        %1022 = vmatprep.subr.bf16.mxu0 0
        %1023 = vmatpush1.bf16.xpose.msra.mxu0 0
        %1024 = vmatprep.subr.bf16.mxu0 0
        %1025 = vmatpush1.bf16.xpose.msra.mxu0 0
        %1026 = vmatprep.subr.bf16.mxu0 0
        %1027 = vmatpush1.bf16.xpose.msra.mxu0 0
        %1028 = vmatprep.subr.bf16.mxu0 0
        %1029 = vmatpush1.bf16.xpose.msra.mxu0 0
        %1030 = vmatprep.subr.bf16.mxu0 0
        %1031 = vmatpush1.bf16.xpose.msra.mxu0 0
        %1032 = vmatprep.subr.bf16.mxu0 0
        %1033 = vmatpush1.bf16.xpose.msra.mxu0 0
        %1034 = vmatprep.subr.bf16.mxu0 0
        %1035 = vmatpush1.bf16.xpose.msra.mxu0 0
        %1036 = vmatprep.subr.bf16.mxu0 0
        %1037 = vmatpush1.bf16.xpose.msra.mxu0 0
        %1038 = vmatprep.subr.bf16.mxu0 0
        %1039 = vmatpush1.bf16.xpose.msra.mxu0 0
        %1040 = vmatprep.subr.bf16.mxu0 0
        %1041 = vmatpush1.bf16.xpose.msra.mxu0 0
        %1042 = vmatprep.mubr.bf16.mxu0 0
        %1043 = vmatmul.mubr.bf16.gmra.mrb[0].mxu0 %v1005
        %v1044 = vpop.f32.mrb[0].mxu0
        %v1045 = vadd.f32 0.0, %v1044
        %v1046 = vpop.f32.mrb[0].mxu0
        %v1047 = vpop.f32.mrb[0].mxu0
        %v1048 = vpop.f32.mrb[0].mxu0
        %1049 = vdwg.mxu0
        %v1050 = vsel %vm662, %v1045, -inf
        %1051 = vmax.xlane.f32.xlu0 %v1050
        %v1052 = vpop.xlane.xlu0 %1051
        %v1053 = vsub.f32 %v1045, %v1052
        %v1054 = vmul.f32 %v1053, 1.442695
        %v1055 = vpow.pop %v1054
        %v1056 = vsel %vm662, %v1055, 0.0
        %1057 = vadd.xlane.f32.xlu0 %v1056
        %v1058 = vpop.xlane.xlu0 %1057
        %v1059 = vrcp.pop %v1058
        %v1060 = vmul.f32 %v1055, %v1059
        %s1061 = scalar_lea.vmem %s573, 24 [#allocation4]
        %1062 = vst.msk [vmem:[%s1061] sm:$0xff] %vm662, %v1060
        %v1063 = vpack.c.bf16 %v1060, %v1060
        %1064 = vrot.lane.b32.xlu0 %v839, 104
        %v1065 = vpop.permute.xlu0 %1064
        %v1067 = vsel %vm662, %v1063, 0
        %v1070 = vsel %vm725, %v1065, 0
        %1072 = vmatprep.subr.bf16.mxu0 0
        %1073 = vmatpush1.bf16.msra.mxu0 %v1070
        %1074 = vmatprep.subr.bf16.mxu0 0
        %1075 = vmatpush1.bf16.msra.mxu0 0
        %1076 = vmatprep.subr.bf16.mxu0 0
        %1077 = vmatpush1.bf16.msra.mxu0 0
        %1078 = vmatprep.subr.bf16.mxu0 0
        %1079 = vmatpush1.bf16.msra.mxu0 0
        %1080 = vmatprep.subr.bf16.mxu0 0
        %1081 = vmatpush1.bf16.msra.mxu0 0
        %1082 = vmatprep.subr.bf16.mxu0 0
        %1083 = vmatpush1.bf16.msra.mxu0 0
        %1084 = vmatprep.subr.bf16.mxu0 0
        %1085 = vmatpush1.bf16.msra.mxu0 0
        %1086 = vmatprep.subr.bf16.mxu0 0
        %1087 = vmatpush1.bf16.msra.mxu0 0
        %1088 = vmatprep.subr.bf16.mxu0 0
        %1089 = vmatpush1.bf16.msra.mxu0 0
        %1090 = vmatprep.subr.bf16.mxu0 0
        %1091 = vmatpush1.bf16.msra.mxu0 0
        %1092 = vmatprep.subr.bf16.mxu0 0
        %1093 = vmatpush1.bf16.msra.mxu0 0
        %1094 = vmatprep.subr.bf16.mxu0 0
        %1095 = vmatpush1.bf16.msra.mxu0 0
        %1096 = vmatprep.subr.bf16.mxu0 0
        %1097 = vmatpush1.bf16.msra.mxu0 0
        %1098 = vmatprep.subr.bf16.mxu0 0
        %1099 = vmatpush1.bf16.msra.mxu0 0
        %1100 = vmatprep.subr.bf16.mxu0 0
        %1101 = vmatpush1.bf16.msra.mxu0 0
        %1102 = vmatprep.subr.bf16.mxu0 0
        %1103 = vmatpush1.bf16.msra.mxu0 0
        %1104 = vmatprep.mubr.bf16.mxu0 0
        %1105 = vmatmul.mubr.bf16.gmra.mrb[0].mxu0 %v1067
        %v1106 = vpop.f32.mrb[0].mxu0
        %v1107 = vadd.f32 0.0, %v1106
        %v1108 = vpop.f32.mrb[0].mxu0
        %v1109 = vpop.f32.mrb[0].mxu0
        %v1110 = vpop.f32.mrb[0].mxu0
        %1111 = vdwg.mxu0
        %1113 = vrot.lane.b32.xlu0 %v883, 8
        %v1114 = vpop.permute.xlu0 %1113
        %1117 = vrot.lane.b32.xlu0 %v995, 16
        %v1118 = vpop.permute.xlu0 %1117
        %1121 = vrot.lane.b32.xlu0 %v1107, 24
        %v1122 = vpop.permute.xlu0 %1121
        %v1124 = vsel %vm662, %v764, %v1114
        %vm1125 = vcmask 130048
        %v1126 = vsel %vm1125, %v1124, %v1118
        %vm1127 = vcmask 195584
        %v1128 = vsel %vm1127, %v1126, %v1122
        %v1129 = vpack.c.bf16 %v1128, %v1128
        %v1130 = vld [vmem:[%s5] sm:$0xf]
        %v1131 = vld [vmem:[%s5 + $0x4] sm:$0xf]
        %v1132 = vld [vmem:[%s5 + $0x8] sm:$0xf]
        %v1133 = vld [vmem:[%s5 + $0xc] sm:$0xf]
        %v1134 = vld [vmem:[%s6] sm:$0x1]
        %v1136 = vlaneseq
        %v1137 = vshrl.u32 %v1136, 7
        %v1138 = vsub.s32 0, %v1137
        %v1139 = vrot.slane %v1134, %v1138
        %v1145 = vunpack.c.l.b16 %v1130
        %v1146 = vunpack.c.l.b16 %v1131
        %v1147 = vunpack.c.l.b16 %v1132
        %v1148 = vunpack.c.l.b16 %v1133
        %v1149 = vpack.c.b16 %v1146, %v1145
        %v1150 = vpack.c.b16 %v1148, %v1147
        %v1154 = vsel %vm617, %v1129, 0
        %1156 = vmatprep.subr.bf16.mxu0 0
        %1157 = vmatpush1.bf16.msra.mxu0 %v1149
        %1158 = vmatprep.subr.bf16.mxu0 0
        %1159 = vmatpush1.bf16.msra.mxu0 %v1150
        %1160 = vmatprep.subr.bf16.mxu0 0
        %1161 = vmatpush1.bf16.msra.mxu0 0
        %1162 = vmatprep.subr.bf16.mxu0 0
        %1163 = vmatpush1.bf16.msra.mxu0 0
        %1164 = vmatprep.subr.bf16.mxu0 0
        %1165 = vmatpush1.bf16.msra.mxu0 0
        %1166 = vmatprep.subr.bf16.mxu0 0
        %1167 = vmatpush1.bf16.msra.mxu0 0
        %1168 = vmatprep.subr.bf16.mxu0 0
        %1169 = vmatpush1.bf16.msra.mxu0 0
        %1170 = vmatprep.subr.bf16.mxu0 0
        %1171 = vmatpush1.bf16.msra.mxu0 0
        %1172 = vmatprep.subr.bf16.mxu0 0
        %1173 = vmatpush1.bf16.msra.mxu0 0
        %1174 = vmatprep.subr.bf16.mxu0 0
        %1175 = vmatpush1.bf16.msra.mxu0 0
        %1176 = vmatprep.subr.bf16.mxu0 0
        %1177 = vmatpush1.bf16.msra.mxu0 0
        %1178 = vmatprep.subr.bf16.mxu0 0
        %1179 = vmatpush1.bf16.msra.mxu0 0
        %1180 = vmatprep.subr.bf16.mxu0 0
        %1181 = vmatpush1.bf16.msra.mxu0 0
        %1182 = vmatprep.subr.bf16.mxu0 0
        %1183 = vmatpush1.bf16.msra.mxu0 0
        %1184 = vmatprep.subr.bf16.mxu0 0
        %1185 = vmatpush1.bf16.msra.mxu0 0
        %1186 = vmatprep.subr.bf16.mxu0 0
        %1187 = vmatpush1.bf16.msra.mxu0 0
        %1188 = vmatprep.mubr.bf16.mxu0 0
        %1189 = vmatmul.mubr.bf16.gmra.mrb[0].mxu0 %v1154
        %v1190 = vpop.f32.mrb[0].mxu0
        %v1191 = vadd.f32 %v1139, %v1190
        %v1192 = vpop.f32.mrb[0].mxu0
        %v1193 = vpop.f32.mrb[0].mxu0
        %v1194 = vpop.f32.mrb[0].mxu0
        %1195 = vdwg.mxu0
        %v1196 = vadd.f32 %v590, %v1191
        %v1197 = vsel %vm617, %v1196, 0.0
        %1198 = vadd.xlane.f32.xlu0 %v1197
        %v1199 = vpop.xlane.xlu0 %1198
        %v1200 = vrcp.pop 32.0
        %v1201 = vmul.f32 %v1199, %v1200
        %v1202 = vmul.f32 %v1196, %v1196
        %v1203 = vsel %vm617, %v1202, 0.0
        %1204 = vadd.xlane.f32.xlu0 %v1203
        %v1205 = vpop.xlane.xlu0 %1204
        %v1206 = vmul.f32 %v1205, %v1200
        %v1207 = vmul.f32 %v1201, %v1201
        %v1208 = vsub.f32 %v1206, %v1207
        %v1209 = vmax.f32 %v1208, 0.0
        %v1210 = vsub.f32 %v1196, %v1201
        %v1211 = vadd.f32 %v1209, 1e-05
        %v1212 = vrsqrt.pop %v1211
        %v1213 = vmul.f32 %v1210, %v1212
        %v1214 = vld [vmem:[%s7] sm:$0x1]
        %v1216 = vlaneseq
        %v1217 = vshrl.u32 %v1216, 7
        %v1218 = vsub.s32 0, %v1217
        %v1219 = vrot.slane %v1214, %v1218
        %v1221 = vmul.f32 %v1213, %v1219
        %v1222 = vld [vmem:[%s8] sm:$0x1]
        %v1224 = vlaneseq
        %v1225 = vshrl.u32 %v1224, 7
        %v1226 = vsub.s32 0, %v1225
        %v1227 = vrot.slane %v1222, %v1226
        %v1229 = vadd.f32 %v1221, %v1227
        %v1230 = vpack.c.bf16 %v1229, %v1229
        %v1231 = vld [vmem:[%s9] sm:$0xf]
        %v1232 = vld [vmem:[%s9 + $0x4] sm:$0xf]
        %v1233 = vld [vmem:[%s9 + $0x8] sm:$0xf]
        %v1234 = vld [vmem:[%s9 + $0xc] sm:$0xf]
        %v1235 = vld [vmem:[%s10] sm:$0x1]
        %v1237 = vlaneseq
        %v1238 = vshrl.u32 %v1237, 7
        %v1239 = vsub.s32 0, %v1238
        %v1240 = vrot.slane %v1235, %v1239
        %v1246 = vunpack.c.l.b16 %v1231
        %v1247 = vunpack.c.l.b16 %v1232
        %v1248 = vunpack.c.l.b16 %v1233
        %v1249 = vunpack.c.l.b16 %v1234
        %v1250 = vpack.c.b16 %v1247, %v1246
        %v1251 = vpack.c.b16 %v1249, %v1248
        %v1255 = vsel %vm617, %v1230, 0
        %1257 = vmatprep.subr.bf16.mxu0 0
        %1258 = vmatpush1.bf16.msra.mxu0 %v1250
        %1259 = vmatprep.subr.bf16.mxu0 0
        %1260 = vmatpush1.bf16.msra.mxu0 %v1251
        %1261 = vmatprep.subr.bf16.mxu0 0
        %1262 = vmatpush1.bf16.msra.mxu0 0
        %1263 = vmatprep.subr.bf16.mxu0 0
        %1264 = vmatpush1.bf16.msra.mxu0 0
        %1265 = vmatprep.subr.bf16.mxu0 0
        %1266 = vmatpush1.bf16.msra.mxu0 0
        %1267 = vmatprep.subr.bf16.mxu0 0
        %1268 = vmatpush1.bf16.msra.mxu0 0
        %1269 = vmatprep.subr.bf16.mxu0 0
        %1270 = vmatpush1.bf16.msra.mxu0 0
        %1271 = vmatprep.subr.bf16.mxu0 0
        %1272 = vmatpush1.bf16.msra.mxu0 0
        %1273 = vmatprep.subr.bf16.mxu0 0
        %1274 = vmatpush1.bf16.msra.mxu0 0
        %1275 = vmatprep.subr.bf16.mxu0 0
        %1276 = vmatpush1.bf16.msra.mxu0 0
        %1277 = vmatprep.subr.bf16.mxu0 0
        %1278 = vmatpush1.bf16.msra.mxu0 0
        %1279 = vmatprep.subr.bf16.mxu0 0
        %1280 = vmatpush1.bf16.msra.mxu0 0
        %1281 = vmatprep.subr.bf16.mxu0 0
        %1282 = vmatpush1.bf16.msra.mxu0 0
        %1283 = vmatprep.subr.bf16.mxu0 0
        %1284 = vmatpush1.bf16.msra.mxu0 0
        %1285 = vmatprep.subr.bf16.mxu0 0
        %1286 = vmatpush1.bf16.msra.mxu0 0
        %1287 = vmatprep.subr.bf16.mxu0 0
        %1288 = vmatpush1.bf16.msra.mxu0 0
        %1289 = vmatprep.mubr.bf16.mxu0 0
        %1290 = vmatmul.mubr.bf16.gmra.mrb[0].mxu0 %v1255
        %v1291 = vpop.f32.mrb[0].mxu0
        %v1292 = vadd.f32 %v1240, %v1291
        %v1293 = vpop.f32.mrb[0].mxu0
        %v1294 = vpop.f32.mrb[0].mxu0
        %v1295 = vpop.f32.mrb[0].mxu0
        %1296 = vdwg.mxu0
        %v1297 = vmax.f32 %v1292, 0.0
        %v1298 = vpack.c.bf16 %v1297, %v1297
        %v1299 = vld [vmem:[%s11] sm:$0xf]
        %v1300 = vld [vmem:[%s11 + $0x4] sm:$0xf]
        %v1301 = vld [vmem:[%s11 + $0x8] sm:$0xf]
        %v1302 = vld [vmem:[%s11 + $0xc] sm:$0xf]
        %v1303 = vld [vmem:[%s11 + $0x10] sm:$0xf]
        %v1304 = vld [vmem:[%s11 + $0x14] sm:$0xf]
        %v1305 = vld [vmem:[%s11 + $0x18] sm:$0xf]
        %v1306 = vld [vmem:[%s11 + $0x1c] sm:$0xf]
        %v1307 = vld [vmem:[%s11 + $0x20] sm:$0xf]
        %v1308 = vld [vmem:[%s11 + $0x24] sm:$0xf]
        %v1309 = vld [vmem:[%s11 + $0x28] sm:$0xf]
        %v1310 = vld [vmem:[%s11 + $0x2c] sm:$0xf]
        %v1311 = vld [vmem:[%s11 + $0x30] sm:$0xf]
        %v1312 = vld [vmem:[%s11 + $0x34] sm:$0xf]
        %v1313 = vld [vmem:[%s11 + $0x38] sm:$0xf]
        %v1314 = vld [vmem:[%s11 + $0x3c] sm:$0xf]
        %v1315 = vld [vmem:[%s12] sm:$0x1]
        %v1317 = vlaneseq
        %v1318 = vshrl.u32 %v1317, 7
        %v1319 = vsub.s32 0, %v1318
        %v1320 = vrot.slane %v1315, %v1319
        %v1338 = vunpack.c.l.b16 %v1299
        %v1339 = vunpack.c.l.b16 %v1300
        %v1340 = vunpack.c.l.b16 %v1301
        %v1341 = vunpack.c.l.b16 %v1302
        %v1342 = vunpack.c.l.b16 %v1303
        %v1343 = vunpack.c.l.b16 %v1304
        %v1344 = vunpack.c.l.b16 %v1305
        %v1345 = vunpack.c.l.b16 %v1306
        %v1346 = vunpack.c.l.b16 %v1307
        %v1347 = vunpack.c.l.b16 %v1308
        %v1348 = vunpack.c.l.b16 %v1309
        %v1349 = vunpack.c.l.b16 %v1310
        %v1350 = vunpack.c.l.b16 %v1311
        %v1351 = vunpack.c.l.b16 %v1312
        %v1352 = vunpack.c.l.b16 %v1313
        %v1353 = vunpack.c.l.b16 %v1314
        %v1354 = vpack.c.b16 %v1339, %v1338
        %v1355 = vpack.c.b16 %v1341, %v1340
        %v1356 = vpack.c.b16 %v1343, %v1342
        %v1357 = vpack.c.b16 %v1345, %v1344
        %v1358 = vpack.c.b16 %v1347, %v1346
        %v1359 = vpack.c.b16 %v1349, %v1348
        %v1360 = vpack.c.b16 %v1351, %v1350
        %v1361 = vpack.c.b16 %v1353, %v1352
        %1370 = vmatprep.subr.bf16.mxu0 0
        %1371 = vmatpush1.bf16.msra.mxu0 %v1354
        %1372 = vmatprep.subr.bf16.mxu0 0
        %1373 = vmatpush1.bf16.msra.mxu0 %v1355
        %1374 = vmatprep.subr.bf16.mxu0 0
        %1375 = vmatpush1.bf16.msra.mxu0 %v1356
        %1376 = vmatprep.subr.bf16.mxu0 0
        %1377 = vmatpush1.bf16.msra.mxu0 %v1357
        %1378 = vmatprep.subr.bf16.mxu0 0
        %1379 = vmatpush1.bf16.msra.mxu0 %v1358
        %1380 = vmatprep.subr.bf16.mxu0 0
        %1381 = vmatpush1.bf16.msra.mxu0 %v1359
        %1382 = vmatprep.subr.bf16.mxu0 0
        %1383 = vmatpush1.bf16.msra.mxu0 %v1360
        %1384 = vmatprep.subr.bf16.mxu0 0
        %1385 = vmatpush1.bf16.msra.mxu0 %v1361
        %1386 = vmatprep.subr.bf16.mxu0 0
        %1387 = vmatpush1.bf16.msra.mxu0 0
        %1388 = vmatprep.subr.bf16.mxu0 0
        %1389 = vmatpush1.bf16.msra.mxu0 0
        %1390 = vmatprep.subr.bf16.mxu0 0
        %1391 = vmatpush1.bf16.msra.mxu0 0
        %1392 = vmatprep.subr.bf16.mxu0 0
        %1393 = vmatpush1.bf16.msra.mxu0 0
        %1394 = vmatprep.subr.bf16.mxu0 0
        %1395 = vmatpush1.bf16.msra.mxu0 0
        %1396 = vmatprep.subr.bf16.mxu0 0
        %1397 = vmatpush1.bf16.msra.mxu0 0
        %1398 = vmatprep.subr.bf16.mxu0 0
        %1399 = vmatpush1.bf16.msra.mxu0 0
        %1400 = vmatprep.subr.bf16.mxu0 0
        %1401 = vmatpush1.bf16.msra.mxu0 0
        %1402 = vmatprep.mubr.bf16.mxu0 0
        %1403 = vmatmul.mubr.bf16.gmra.mrb[0].mxu0 %v1298
        %v1404 = vpop.f32.mrb[0].mxu0
        %v1405 = vadd.f32 %v1320, %v1404
        %v1406 = vpop.f32.mrb[0].mxu0
        %v1407 = vpop.f32.mrb[0].mxu0
        %v1408 = vpop.f32.mrb[0].mxu0
        %1409 = vdwg.mxu0
        %v1410 = vadd.f32 %v1229, %v1405
        %v1411 = vsel %vm617, %v1410, 0.0
        %1412 = vadd.xlane.f32.xlu0 %v1411
        %v1413 = vpop.xlane.xlu0 %1412
        %v1414 = vmul.f32 %v1413, %v1200
        %v1415 = vmul.f32 %v1410, %v1410
        %v1416 = vsel %vm617, %v1415, 0.0
        %1417 = vadd.xlane.f32.xlu0 %v1416
        %v1418 = vpop.xlane.xlu0 %1417
        %v1419 = vmul.f32 %v1418, %v1200
        %v1420 = vmul.f32 %v1414, %v1414
        %v1421 = vsub.f32 %v1419, %v1420
        %v1422 = vmax.f32 %v1421, 0.0
        %v1423 = vsub.f32 %v1410, %v1414
        %v1424 = vadd.f32 %v1422, 1e-05
        %v1425 = vrsqrt.pop %v1424
        %v1426 = vmul.f32 %v1423, %v1425
        %v1427 = vld [vmem:[%s13] sm:$0x1]
        %v1429 = vlaneseq
        %v1430 = vshrl.u32 %v1429, 7
        %v1431 = vsub.s32 0, %v1430
        %v1432 = vrot.slane %v1427, %v1431
        %v1434 = vmul.f32 %v1426, %v1432
        %v1435 = vld [vmem:[%s14] sm:$0x1]
        %v1437 = vlaneseq
        %v1438 = vshrl.u32 %v1437, 7
        %v1439 = vsub.s32 0, %v1438
        %v1440 = vrot.slane %v1435, %v1439
        %v1442 = vadd.f32 %v1434, %v1440
        %1443 = vst.msk [vmem:[%s566] sm:$0xff] %vm617, %v1442
        %s1444 = sand.u32 %s388, 1
        %s1445 = scalar_lea.sflag [#allocation3], %s1444
        %s1446 = sand.u32 %s388, 1
        %s1447 = smul.addr %s1446, 8
        %s1448 = scalar_lea.vmem [#allocation2], %s1447
        %s1449 = sand.u32 %s416, 1
        %s1450 = scalar_lea.sflag [#allocation5], %s1449
        %s1451 = sand.u32 %s416, 1
        %s1452 = smul.addr %s1451, 32
        %s1453 = scalar_lea.vmem [#allocation4], %s1452
        // Predicated region
        $region81: #{encoder_layer.3} parent=79 // pred_check
          %p1454 = pneg %p398
        $region82: #{encoder_layer.3} parent=79 // pred_check_branch
          %1456 = sbr.rel (%p1454) target = $region84
        $region83: #{encoder_layer.3} parent=79 // pred_region
          %s1458 = ssub.s32 128, 128
          %1459 = vsyncadd %s1445, %s1458
          %s1460 = sadd.s32 %s39, %s38
          %s1461 = smul.addr %s1460, 128
          %s1462 = scalar_lea.hbm %s15, %s1461
          %s1464 = sshll.u32 %s1448, 4
          %s1465 = int_to_ptr.vmem [resolvable:$true] %s1464
          %1467 = dma.vmem_to_hbm [thread:$0]  %s1465, 128, %s1462, %s1445
        $region84: #{encoder_layer.3} parent=79 // pred_fallthru
          _
        // Predicated region
        $region85: #{encoder_layer.3} parent=79 // pred_check
          %p1468 = pneg %p426
        $region86: #{encoder_layer.3} parent=79 // pred_check_branch
          %1470 = sbr.rel (%p1468) target = $region88
        $region87: #{encoder_layer.3} parent=79 // pred_region
          %s1472 = ssub.s32 512, 512
          %1473 = vsyncadd %s1450, %s1472
          %s1474 = smul.addr %s38, 4
          %s1475 = sadd.s32 %s39, %s1474
          %s1476 = smul.addr %s1475, 128
          %s1477 = scalar_lea.hbm %s16, %s1476
          %s1478 = sshll.u32 %s1453, 4
          %s1479 = int_to_ptr.vmem [resolvable:$true] %s1478
          %1484 = dma.vmem_to_hbm [thread:$0]  %s1479, 512, %s1477, %s1450, 128, 128, 8
        $region88: #{encoder_layer.3} parent=79 // pred_fallthru
          _
      $region80: #{encoder_layer.3} parent=5 // pred_fallthru
        _
      %p1485 = scmp.le.s32.totalorder 2, %s29
      // Predicated region
      $region89: #{encoder_layer.3} parent=5 // pred_check
        %p1486 = pneg %p1485
      $region90: #{encoder_layer.3} parent=5 // pred_check_branch
        %1488 = sbr.rel (%p1486) target = $region92
      $region91: #{encoder_layer.3} parent=5 // pred_region
        %s1489 = ssub.s32 %s29, 2
        // Predicated region
        $region93: #{encoder_layer.3} parent=91 // pred_check
          %p1490 = pneg %p404
        $region94: #{encoder_layer.3} parent=91 // pred_check_branch
          %1492 = sbr.rel (%p1490) target = $region96
        $region95: #{encoder_layer.3} parent=91 // pred_region
          %s1493 = sand.u32 %s389, 1
          %s1494 = scalar_lea.sflag [#allocation3], %s1493
          %s1495 = sand.u32 %s389, 1
          %s1496 = smul.addr %s1495, 8
          %s1497 = scalar_lea.vmem [#allocation2], %s1496
          %1498 = dma.done %s1494, 128
        $region96: #{encoder_layer.3} parent=91 // pred_fallthru
          _
        // Predicated region
        $region97: #{encoder_layer.3} parent=91 // pred_check
          %p1499 = pneg %p432
        $region98: #{encoder_layer.3} parent=91 // pred_check_branch
          %1501 = sbr.rel (%p1499) target = $region100
        $region99: #{encoder_layer.3} parent=91 // pred_region
          %s1502 = sand.u32 %s417, 1
          %s1503 = scalar_lea.sflag [#allocation5], %s1502
          %s1504 = sand.u32 %s417, 1
          %s1505 = smul.addr %s1504, 32
          %s1506 = scalar_lea.vmem [#allocation4], %s1505
          %1507 = dma.done %s1503, 512
        $region100: #{encoder_layer.3} parent=91 // pred_fallthru
          _
      $region92: #{encoder_layer.3} parent=5 // pred_fallthru
        _
    $region6: #{encoder_layer.3} parent=1 // loop_footer
      %s33 = sadd.s32 1, %s29
    $region7: #{encoder_layer.3} parent=1 // loop_footer_branch
      %28 = sbr.rel target = $region3
    $region8: #{encoder_layer.3} parent=1 // loop_exit
      _
    %1508 = vsyncpa [#allocation3], 1
    %s1509 = scalar_lea.sflag [#allocation3], 1
    %1510 = vsyncpa %s1509, 1
    %1511 = vsyncpa [#allocation5], 1
    %s1512 = scalar_lea.sflag [#allocation5], 1
    %1513 = vsyncpa %s1512, 1

</llo_original>
